<compile_context>
chip_gen: v7x
topology: tpu7x:2x2x1
jax: 0.10.0
libtpu: 0.0.40
codegen_flags: <defaults>
</compile_context>

<pallas_src>
import numpy as np
import jax
import jax.numpy as jnp
from jax.experimental import pallas as pl
from jax.experimental.pallas import tpu as pltpu

LANES = 128

# aux_pairs plane ordering (18 full uint64 operands, each as (hi, lo)):
#  0: r        1: r_0      2: delta_0   3: eta_p_0
#  4: x_0      5: x_bit_0  6: r_1       7: beta_p
#  8..12: A1, B1, C1, E1_server, F1_server   (MSB.mult Beaver triple + net)
# 13..17: A2, B2, C2, E2_server, F2_server   (ReLU.mult Beaver triple + net)
# bits_packed: single uint32 plane, bit0 = eta_pp, bit1 = beta (both in {0,1}).


# ----------------------------------------------------------------------------
# Pallas kernel: full SecureReLU client protocol, uint64 emulated via 2x uint32
# ----------------------------------------------------------------------------
def _secure_relu_kernel(x_ref, bits_ref, aux_ref, o_ref):
    u32 = jnp.uint32
    MAX = u32(0xFFFFFFFF)
    Z = u32(0)

    def ld(i):                                     # aux operand -> (hi, lo)
        return (aux_ref[i, 0], aux_ref[i, 1])

    # ---- uint64 limb arithmetic (mod 2^64), values carried as (hi, lo) ----
    def add(a, b):
        lo = a[1] + b[1]
        carry = (lo < a[1]).astype(u32)
        return (a[0] + b[0] + carry, lo)

    def sub(a, b):
        lo = a[1] - b[1]
        borrow = (a[1] < b[1]).astype(u32)
        return (a[0] - b[0] - borrow, lo)

    def add_bit(a, bit):                           # a + bit, bit in {0,1}
        lo = a[1] + bit
        carry = (lo < a[1]).astype(u32)
        return (a[0] + carry, lo)

    def sub_bit(a, bit):                           # a - bit, bit in {0,1}
        lo = a[1] - bit
        borrow = (a[1] < bit).astype(u32)
        return (a[0] - borrow, lo)

    def add_c(a, b):                               # add with 64-bit carry-out
        lo = a[1] + b[1]
        c_lo = (lo < a[1]).astype(u32)
        hi1 = a[0] + b[0]
        c_hi1 = (hi1 < a[0]).astype(u32)
        hi = hi1 + c_lo
        c_hi2 = (hi < c_lo).astype(u32)
        return (hi, lo), c_hi1 | c_hi2

    def sub_b(a, b):                               # sub with 64-bit borrow-out
        lo = a[1] - b[1]
        b_lo = (a[1] < b[1]).astype(u32)
        hi1 = a[0] - b[0]
        b_hi1 = (a[0] < b[0]).astype(u32)
        hi = hi1 - b_lo
        b_hi2 = (hi1 < b_lo).astype(u32)
        return (hi, lo), b_hi1 | b_hi2

    def lt(a, b):                                  # unsigned 64-bit a < b -> {0,1}
        return ((a[0] < b[0]) | ((a[0] == b[0]) & (a[1] < b[1]))).astype(u32)

    def dbl(a):                                    # (a + a) mod 2^64 == a << 1
        return ((a[0] << 1) | (a[1] >> 31), a[1] << 1)

    def mul(a, b):                                 # 64x64 -> low 64 bits
        ah, al = a
        bh, bl = b
        x_l = al & u32(0xFFFF)
        x_h = al >> 16
        y_l = bl & u32(0xFFFF)
        y_h = bl >> 16
        ll = x_l * y_l
        lh = x_l * y_h
        hl = x_h * y_l
        hh = x_h * y_h
        cross = lh + hl
        cross_c = (cross < lh).astype(u32)
        lo = ll + (cross << 16)
        c1 = (lo < ll).astype(u32)
        hi = hh + (cross >> 16) + (cross_c << 16) + c1
        hi = hi + al * bh + ah * bl
        return (hi, lo)

    def sel_bit(bit_lo, y):                        # bit (0/1) * y via select
        m = bit_lo != Z
        return (jnp.where(m, y[0], Z), jnp.where(m, y[1], Z))

    def neg(a):                                    # (0 - a) mod 2^64
        lo = Z - a[1]
        borrow = (a[1] != Z).astype(u32)
        return (Z - a[0] - borrow, lo)

    # ---- mod (2^64 - 1) helpers (SecureModule.add/sub_mode_L_minus_one) ----
    def wrap_max(a):                               # map 2^64-1 -> 0
        is_max = (a[0] == MAX) & (a[1] == MAX)
        return (jnp.where(is_max, Z, a[0]), jnp.where(is_max, Z, a[1]))

    def add_Lm1(a, b):
        r, c = add_c(a, b)                         # c == 64-bit carry-out
        return wrap_max(add_bit(r, c))

    def add_Lm1_bit(a, bit):                       # a + (0, bit)  mod 2^64-1
        lo = a[1] + bit
        c_lo = (lo < a[1]).astype(u32)
        hi = a[0] + c_lo
        c = (hi < c_lo).astype(u32)                # 64-bit carry-out
        return wrap_max(add_bit((hi, lo), c))

    def dbl_Lm1(a):                                # add_Lm1(a, a) == rotl64(a, 1)
        hi = (a[0] << 1) | (a[1] >> 31)
        lo = (a[1] << 1) | (a[0] >> 31)
        return wrap_max((hi, lo))

    def sub_Lm1(a, b):
        r, bo = sub_b(a, b)                        # bo == (b > a)
        return sub_bit(r, bo)

    def sub_Lm1_bit(a, bit):                       # a - (0, bit)  mod 2^64-1
        lo = a[1] - bit
        b_lo = (a[1] < bit).astype(u32)
        hi = a[0] - b_lo
        bo = (a[0] < b_lo).astype(u32)             # 64-bit borrow-out == (bit > a)
        return sub_bit((hi, lo), bo)

    # ---- SecureMultiplicationClient.forward ----
    def secure_mult(Xs, Ys, A, B, C, E_srv, F_srv):
        E = add(E_srv, sub(Xs, A))
        F = add(F_srv, sub(Ys, B))
        return add(add(mul(Xs, F), mul(Ys, E)), C)

    # ---- operands ----
    bits = bits_ref[...]
    eta_pp_lo = bits & u32(1)                      # prf_01 bit {0,1}
    beta_lo = (bits >> 1) & u32(1)                 # prf_01 bit {0,1}
    X = (x_ref[0], x_ref[1])

    # ---- ShareConvertClient.forward(X) ----
    r_rand = ld(0)
    r0_rand = ld(1)
    alpha_bit = lt(r_rand, r0_rand)                # (r < r_0) -> {0,1}
    _, beta0_bit = add_c(X, r0_rand)               # overflow of a_0 + r_0
    delta_0 = ld(2)
    eta_p_0 = ld(3)
    t0 = sel_bit(eta_pp_lo, eta_p_0)               # eta_pp * eta_p_0
    t1 = dbl_Lm1(t0)                               # add_Lm1(t0, t0)
    t2 = sub_Lm1((Z, eta_pp_lo), t1)               # eta_pp - t1 (scalar hi limb)
    eta_0 = add_Lm1(eta_p_0, t2)
    t0 = add_Lm1(delta_0, eta_0)
    t1 = sub_Lm1_bit(t0, u32(1))
    t2 = sub_Lm1_bit(t1, alpha_bit)
    theta_0 = add_Lm1_bit(t2, beta0_bit)           # add_Lm1(beta_0, t2)
    y_0 = sub_Lm1(X, theta_0)

    # ---- SecureMSBClient.forward(y_0) ----
    x_0 = ld(4)
    x_bit_0 = ld(5)
    r_1 = ld(6)
    beta_p = ld(7)
    yy = dbl_Lm1(y_0)                              # add_Lm1(y_0, y_0)
    r_0m = add_Lm1(x_0, yy)
    rr = add_Lm1(r_0m, r_1)
    t = sel_bit(beta_lo, beta_p)                   # beta * beta_p
    gamma_0 = sub(beta_p, dbl(t))                  # beta_p - 2*beta*beta_p
    r_bit_lo = rr[1] & u32(1)                      # rr % 2 (a bit)
    t = sel_bit(r_bit_lo, x_bit_0)                 # (rr%2) * x_bit_0
    delta_0m = sub(x_bit_0, dbl(t))                # x_bit - 2*(rr%2)*x_bit
    A1, B1, C1 = ld(8), ld(9), ld(10)
    E1s, F1s = ld(11), ld(12)
    theta_0m = secure_mult(gamma_0, delta_0m, A1, B1, C1, E1s, F1s)
    alpha_0 = sub(add(gamma_0, delta_0m), dbl(theta_0m))

    # ---- SecureDReLUClient: -MSB ----
    msb_0 = neg(alpha_0)

    # ---- SecureReLUClient: mult(X, MSB_0) ----
    X2 = (x_ref[0], x_ref[1])                      # reload: cuts X's live range
    A2, B2, C2 = ld(13), ld(14), ld(15)
    E2s, F2s = ld(16), ld(17)
    relu_0 = secure_mult(X2, msb_0, A2, B2, C2, E2s, F2s)

    o_ref[0] = relu_0[0]
    o_ref[1] = relu_0[1]


# ----------------------------------------------------------------------------
# Wrapper
# ----------------------------------------------------------------------------
def secure_relu_client(x_pair, bits_packed, aux_pairs, *, target_tm=512):
    """x_pair:      (2, N, C, H, W) uint32 (hi, lo) limbs of uint64 X_share.
    bits_packed:    (N, C, H, W) uint32; bit0 = eta_pp, bit1 = beta (both {0,1}).
    aux_pairs:      (18, 2, N, C, H, W) uint32 limbs of the remaining PRF /
                    network operands (ordering documented at top of file).
    Returns (2, N, C, H, W) uint32 = (hi, lo) bits of the int64 ReLU share."""
    shape = x_pair.shape[1:]
    n = int(np.prod(shape))
    R = -(-n // LANES)                             # rows of 128 lanes
    n_row = R * LANES

    def prep(a, lead):
        a = a.reshape(lead + (n,))
        if n_row != n:
            # TODO(synk): mask the lane tail in-kernel instead of this pad copy
            # (only taken when numel is not a multiple of 128; never for the
            # shapes exercised here).
            a = jnp.pad(a, [(0, 0)] * len(lead) + [(0, n_row - n)])
        return a.reshape(lead + (R, LANES))

    x_p = prep(x_pair, (2,))
    b_p = prep(bits_packed, ())
    a_p = prep(aux_pairs, (18, 2))

    # Row tiling: single full-height block when it fits (block dim == array dim
    # is always legal); otherwise tiles of <= target_tm rows (multiple of 8).
    # At TM=512 the 41 planes are ~10.25 MiB/step, ~20.5 MiB double-buffered:
    # fits every generation including v7x's 64 MiB VMEM under the 48 MiB limit.
    # No row padding: grid = cdiv(R, TM); Pallas masks the ragged last block.
    if R <= target_tm:
        TM = R
        grid = 1
    else:
        steps = -(-R // target_tm)
        steps += steps & 1                         # even step count -> balanced v7x megacore
        TM = ((-(-R // steps)) + 7) // 8 * 8       # ceil(R/steps) rounded up to 8 sublanes
        grid = -(-R // TM)

    out = pl.pallas_call(
        _secure_relu_kernel,
        out_shape=jax.ShapeDtypeStruct((2, R, LANES), jnp.uint32),
        grid_spec=pltpu.PrefetchScalarGridSpec(
            num_scalar_prefetch=0,
            grid=(grid,),
            in_specs=[pl.BlockSpec((2, TM, LANES), lambda i: (0, i, 0)),
                      pl.BlockSpec((TM, LANES), lambda i: (i, 0)),
                      pl.BlockSpec((18, 2, TM, LANES), lambda i: (0, 0, i, 0))],
            out_specs=pl.BlockSpec((2, TM, LANES), lambda i: (0, i, 0)),
        ),
        compiler_params=pltpu.CompilerParams(
            dimension_semantics=("parallel",),
            vmem_limit_bytes=48 * 1024 * 1024),
    )(x_p, b_p, a_p)

    out = out.reshape(2, n_row)[:, :n].reshape((2,) + shape)
    return out


# ----------------------------------------------------------------------------
# NumPy uint64 reference (mirrors the PyTorch/NumPy module exactly)
# ----------------------------------------------------------------------------
U64 = np.uint64
_MAXV = U64(0xFFFFFFFFFFFFFFFF)


def _np_add_Lm1(a, b):
    ret = a + b
    ret = ret + (ret < a).astype(U64)
    return np.where(ret == _MAXV, U64(0), ret)


def _np_sub_Lm1(a, b):
    return (a - b) - (b > a).astype(U64)


def _np_secure_mult(X, Y, A, B, C, Es, Fs):
    E = Es + (X - A)
    F = Fs + (Y - B)
    return X * F + Y * E + C


def _np_reference(X, aux):
    (eta_pp, r, r_0, delta_0, eta_p_0, beta, x_0, x_bit_0, r_1, beta_p,
     A1, B1, C1, E1s, F1s, A2, B2, C2, E2s, F2s) = aux
    # ShareConvertClient
    alpha = (r < r_0).astype(U64)
    a_tild_0 = X + r_0
    beta_0 = (a_tild_0 < X).astype(U64)
    t0 = eta_pp * eta_p_0
    t1 = _np_add_Lm1(t0, t0)
    t2 = _np_sub_Lm1(eta_pp, t1)
    eta_0 = _np_add_Lm1(eta_p_0, t2)
    t0 = _np_add_Lm1(delta_0, eta_0)
    t1 = _np_sub_Lm1(t0, U64(1))
    t2 = _np_sub_Lm1(t1, alpha)
    theta_0 = _np_add_Lm1(beta_0, t2)
    y_0 = _np_sub_Lm1(X, theta_0)
    # SecureMSBClient
    a_0 = y_0
    yy = _np_add_Lm1(a_0, a_0)
    r_0m = _np_add_Lm1(x_0, yy)
    rr = _np_add_Lm1(r_0m, r_1)
    gamma_0 = beta_p + U64(0) * beta - U64(2) * beta * beta_p
    delta_0m = x_bit_0 + U64(0) * (rr % U64(2)) - U64(2) * (rr % U64(2)) * x_bit_0
    theta_0m = _np_secure_mult(gamma_0, delta_0m, A1, B1, C1, E1s, F1s)
    alpha_0 = gamma_0 + delta_0m - U64(2) * theta_0m
    # SecureDReLUClient
    msb_0 = U64(0) - alpha_0
    # SecureReLUClient
    return _np_secure_mult(X, msb_0, A2, B2, C2, E2s, F2s)


def _to_u64(pair):
    hi = pair[0].astype(np.uint64)
    lo = pair[1].astype(np.uint64)
    return (hi << np.uint64(32)) | lo


# ----------------------------------------------------------------------------
if __name__ == "__main__":
    shape = (2, 4, 16, 16)                         # N, C, H, W (2048 elements)
    key = jax.random.PRNGKey(0)
    keys = jax.random.split(key, 21)

    def rand_u64_pair(k):
        return jax.random.bits(k, (2,) + shape, dtype=jnp.uint32)

    def rand_bit_plane(k):
        return jax.random.bits(k, shape, dtype=jnp.uint32) & jnp.uint32(1)

    x_pair = rand_u64_pair(keys[0])                            # X_share bits
    eta_pp = rand_bit_plane(keys[1])
    beta = rand_bit_plane(keys[2])
    aux_pairs = jnp.stack([rand_u64_pair(keys[3 + i]) for i in range(18)])

    # Inject corner values so the rotate-based add_Lm1(a,a), the 2^64-1 wrap
    # and the carry/borrow paths are exercised (not just random inputs).
    x_np = np.asarray(x_pair).copy()
    x_np[:, 0, 0, 0, 0] = 0xFFFFFFFF               # X = 2^64 - 1
    x_np[:, 0, 0, 0, 1] = 0                        # X = 0
    x_np[0, 0, 0, 0, 2] = 0x80000000               # X = 2^63
    x_np[1, 0, 0, 0, 2] = 0
    x_pair = jnp.asarray(x_np)
    aux_np = np.asarray(aux_pairs).copy()
    aux_np[3, :, 0, 0, 0, 3] = 0xFFFFFFFF          # eta_p_0 = 2^64 - 1
    aux_np[2, :, 0, 0, 0, 4] = 0xFFFFFFFF          # delta_0 = 2^64 - 1
    aux_pairs = jnp.asarray(aux_np)

    bits_packed = eta_pp | (beta << 1)             # bit0 = eta_pp, bit1 = beta

    out_pair = jax.jit(secure_relu_client)(x_pair, bits_packed, aux_pairs)
    out_pair = jax.block_until_ready(out_pair)

    # verify against the NumPy uint64 reference protocol
    x_u64 = _to_u64(np.asarray(x_pair))
    eta_pp_u64 = np.asarray(eta_pp).astype(np.uint64)
    beta_u64 = np.asarray(beta).astype(np.uint64)
    aux_u64 = [_to_u64(a) for a in np.asarray(aux_pairs)]
    aux20 = [eta_pp_u64, aux_u64[0], aux_u64[1], aux_u64[2], aux_u64[3],
             beta_u64, aux_u64[4], aux_u64[5], aux_u64[6], aux_u64[7]] + aux_u64[8:]
    ref_u64 = _np_reference(x_u64, aux20)
    got_u64 = _to_u64(np.asarray(out_pair))
    assert np.array_equal(got_u64, ref_u64), "Pallas kernel mismatch vs reference"

    relu_share_int64 = got_u64.view(np.int64)      # final module output bits
    assert relu_share_int64.shape == shape
    print("KERNEL_OK")
</pallas_src>

<mosaic_0001>
module attributes {stable_mosaic.version = 11 : i64} {
  func.func @_secure_relu_kernel(%arg0: i32, %arg1: memref<2x16x128xi32, #tpu.memory_space<vmem>>, %arg2: memref<16x128xi32, #tpu.memory_space<vmem>>, %arg3: memref<18x2x16x128xi32, #tpu.memory_space<vmem>>, %arg4: memref<2x16x128xi32, #tpu.memory_space<vmem>>) attributes {dimension_semantics = [#tpu.dimension_semantics<parallel>], iteration_bounds = array<i64: 1>, scalar_prefetch = 0 : i64, scratch_operands = 0 : i64, tpu.core_type = #tpu.core_type<tc>, window_params = [{transform_indices = @transform_0, window_bounds = array<i64: 2, 16, 128>}, {transform_indices = @transform_1, window_bounds = array<i64: 16, 128>}, {transform_indices = @transform_2, window_bounds = array<i64: 18, 2, 16, 128>}, {transform_indices = @transform_3, window_bounds = array<i64: 2, 16, 128>}]} {
    %c0 = arith.constant 0 : index
    %c0_0 = arith.constant 0 : index
    %0 = vector.load %arg2[%c0, %c0_0] : memref<16x128xi32, #tpu.memory_space<vmem>>, vector<16x128xi32>
    %c1_i32 = arith.constant 1 : i32
    %1 = vector.broadcast %c1_i32 : i32 to vector<16x128xi32>
    %2 = arith.andi %0, %1 : vector<16x128xi32>
    %c1_i32_1 = arith.constant 1 : i32
    %3 = vector.broadcast %c1_i32_1 : i32 to vector<16x128xi32>
    %4 = arith.shrui %0, %3 : vector<16x128xi32>
    %c1_i32_2 = arith.constant 1 : i32
    %5 = vector.broadcast %c1_i32_2 : i32 to vector<16x128xi32>
    %6 = arith.andi %4, %5 : vector<16x128xi32>
    %c0_3 = arith.constant 0 : index
    %c0_4 = arith.constant 0 : index
    %c0_5 = arith.constant 0 : index
    %7 = vector.load %arg1[%c0_3, %c0_4, %c0_5] : memref<2x16x128xi32, #tpu.memory_space<vmem>>, vector<1x16x128xi32>
    %8 = vector.shape_cast %7 : vector<1x16x128xi32> to vector<16x128xi32>
    %c1 = arith.constant 1 : index
    %c0_6 = arith.constant 0 : index
    %c0_7 = arith.constant 0 : index
    %9 = vector.load %arg1[%c1, %c0_6, %c0_7] : memref<2x16x128xi32, #tpu.memory_space<vmem>>, vector<1x16x128xi32>
    %10 = vector.shape_cast %9 : vector<1x16x128xi32> to vector<16x128xi32>
    %c0_8 = arith.constant 0 : index
    %c0_9 = arith.constant 0 : index
    %c0_10 = arith.constant 0 : index
    %c0_11 = arith.constant 0 : index
    %11 = vector.load %arg3[%c0_8, %c0_9, %c0_10, %c0_11] : memref<18x2x16x128xi32, #tpu.memory_space<vmem>>, vector<1x1x16x128xi32>
    %12 = vector.shape_cast %11 : vector<1x1x16x128xi32> to vector<16x128xi32>
    %c0_12 = arith.constant 0 : index
    %c1_13 = arith.constant 1 : index
    %c0_14 = arith.constant 0 : index
    %c0_15 = arith.constant 0 : index
    %13 = vector.load %arg3[%c0_12, %c1_13, %c0_14, %c0_15] : memref<18x2x16x128xi32, #tpu.memory_space<vmem>>, vector<1x1x16x128xi32>
    %14 = vector.shape_cast %13 : vector<1x1x16x128xi32> to vector<16x128xi32>
    %c1_16 = arith.constant 1 : index
    %c0_17 = arith.constant 0 : index
    %c0_18 = arith.constant 0 : index
    %c0_19 = arith.constant 0 : index
    %15 = vector.load %arg3[%c1_16, %c0_17, %c0_18, %c0_19] : memref<18x2x16x128xi32, #tpu.memory_space<vmem>>, vector<1x1x16x128xi32>
    %16 = vector.shape_cast %15 : vector<1x1x16x128xi32> to vector<16x128xi32>
    %c1_20 = arith.constant 1 : index
    %c1_21 = arith.constant 1 : index
    %c0_22 = arith.constant 0 : index
    %c0_23 = arith.constant 0 : index
    %17 = vector.load %arg3[%c1_20, %c1_21, %c0_22, %c0_23] : memref<18x2x16x128xi32, #tpu.memory_space<vmem>>, vector<1x1x16x128xi32>
    %18 = vector.shape_cast %17 : vector<1x1x16x128xi32> to vector<16x128xi32>
    %19 = arith.cmpi ult, %12, %16 : vector<16x128xi32>
    %20 = arith.cmpi eq, %12, %16 : vector<16x128xi32>
    %21 = arith.cmpi ult, %14, %18 : vector<16x128xi32>
    %22 = arith.andi %20, %21 : vector<16x128xi1>
    %23 = arith.ori %19, %22 : vector<16x128xi1>
    %24 = arith.extui %23 : vector<16x128xi1> to vector<16x128xi32>
    %25 = arith.addi %10, %18 : vector<16x128xi32>
    %26 = arith.cmpi ult, %25, %10 : vector<16x128xi32>
    %27 = arith.extui %26 : vector<16x128xi1> to vector<16x128xi32>
    %28 = arith.addi %8, %16 : vector<16x128xi32>
    %29 = arith.cmpi ult, %28, %8 : vector<16x128xi32>
    %30 = arith.extui %29 : vector<16x128xi1> to vector<16x128xi32>
    %31 = arith.addi %28, %27 : vector<16x128xi32>
    %32 = arith.cmpi ult, %31, %27 : vector<16x128xi32>
    %33 = arith.extui %32 : vector<16x128xi1> to vector<16x128xi32>
    %34 = arith.ori %30, %33 : vector<16x128xi32>
    %c2 = arith.constant 2 : index
    %c0_24 = arith.constant 0 : index
    %c0_25 = arith.constant 0 : index
    %c0_26 = arith.constant 0 : index
    %35 = vector.load %arg3[%c2, %c0_24, %c0_25, %c0_26] : memref<18x2x16x128xi32, #tpu.memory_space<vmem>>, vector<1x1x16x128xi32>
    %36 = vector.shape_cast %35 : vector<1x1x16x128xi32> to vector<16x128xi32>
    %c2_27 = arith.constant 2 : index
    %c1_28 = arith.constant 1 : index
    %c0_29 = arith.constant 0 : index
    %c0_30 = arith.constant 0 : index
    %37 = vector.load %arg3[%c2_27, %c1_28, %c0_29, %c0_30] : memref<18x2x16x128xi32, #tpu.memory_space<vmem>>, vector<1x1x16x128xi32>
    %38 = vector.shape_cast %37 : vector<1x1x16x128xi32> to vector<16x128xi32>
    %c3 = arith.constant 3 : index
    %c0_31 = arith.constant 0 : index
    %c0_32 = arith.constant 0 : index
    %c0_33 = arith.constant 0 : index
    %39 = vector.load %arg3[%c3, %c0_31, %c0_32, %c0_33] : memref<18x2x16x128xi32, #tpu.memory_space<vmem>>, vector<1x1x16x128xi32>
    %40 = vector.shape_cast %39 : vector<1x1x16x128xi32> to vector<16x128xi32>
    %c3_34 = arith.constant 3 : index
    %c1_35 = arith.constant 1 : index
    %c0_36 = arith.constant 0 : index
    %c0_37 = arith.constant 0 : index
    %41 = vector.load %arg3[%c3_34, %c1_35, %c0_36, %c0_37] : memref<18x2x16x128xi32, #tpu.memory_space<vmem>>, vector<1x1x16x128xi32>
    %42 = vector.shape_cast %41 : vector<1x1x16x128xi32> to vector<16x128xi32>
    %c0_i32 = arith.constant 0 : i32
    %43 = vector.broadcast %c0_i32 : i32 to vector<16x128xi32>
    %44 = arith.cmpi ne, %2, %43 : vector<16x128xi32>
    %c0_i32_38 = arith.constant 0 : i32
    %45 = vector.broadcast %c0_i32_38 : i32 to vector<16x128xi32>
    %46 = arith.select %44, %40, %45 : vector<16x128xi1>, vector<16x128xi32>
    %c0_i32_39 = arith.constant 0 : i32
    %47 = vector.broadcast %c0_i32_39 : i32 to vector<16x128xi32>
    %48 = arith.select %44, %42, %47 : vector<16x128xi1>, vector<16x128xi32>
    %c1_i32_40 = arith.constant 1 : i32
    %49 = vector.broadcast %c1_i32_40 : i32 to vector<16x128xi32>
    %50 = arith.shli %46, %49 : vector<16x128xi32>
    %c31_i32 = arith.constant 31 : i32
    %51 = vector.broadcast %c31_i32 : i32 to vector<16x128xi32>
    %52 = arith.shrui %48, %51 : vector<16x128xi32>
    %53 = arith.ori %50, %52 : vector<16x128xi32>
    %c1_i32_41 = arith.constant 1 : i32
    %54 = vector.broadcast %c1_i32_41 : i32 to vector<16x128xi32>
    %55 = arith.shli %48, %54 : vector<16x128xi32>
    %c31_i32_42 = arith.constant 31 : i32
    %56 = vector.broadcast %c31_i32_42 : i32 to vector<16x128xi32>
    %57 = arith.shrui %46, %56 : vector<16x128xi32>
    %58 = arith.ori %55, %57 : vector<16x128xi32>
    %c-1_i32 = arith.constant -1 : i32
    %59 = vector.broadcast %c-1_i32 : i32 to vector<16x128xi32>
    %60 = arith.cmpi eq, %53, %59 : vector<16x128xi32>
    %c-1_i32_43 = arith.constant -1 : i32
    %61 = vector.broadcast %c-1_i32_43 : i32 to vector<16x128xi32>
    %62 = arith.cmpi eq, %58, %61 : vector<16x128xi32>
    %63 = arith.andi %60, %62 : vector<16x128xi1>
    %c0_i32_44 = arith.constant 0 : i32
    %64 = vector.broadcast %c0_i32_44 : i32 to vector<16x128xi32>
    %65 = arith.select %63, %64, %53 : vector<16x128xi1>, vector<16x128xi32>
    %c0_i32_45 = arith.constant 0 : i32
    %66 = vector.broadcast %c0_i32_45 : i32 to vector<16x128xi32>
    %67 = arith.select %63, %66, %58 : vector<16x128xi1>, vector<16x128xi32>
    %68 = arith.subi %2, %67 : vector<16x128xi32>
    %69 = arith.cmpi ult, %2, %67 : vector<16x128xi32>
    %70 = arith.extui %69 : vector<16x128xi1> to vector<16x128xi32>
    %c0_i32_46 = arith.constant 0 : i32
    %71 = vector.broadcast %c0_i32_46 : i32 to vector<16x128xi32>
    %72 = arith.subi %71, %65 : vector<16x128xi32>
    %c0_i32_47 = arith.constant 0 : i32
    %73 = vector.broadcast %c0_i32_47 : i32 to vector<16x128xi32>
    %74 = arith.cmpi ult, %73, %65 : vector<16x128xi32>
    %75 = arith.extui %74 : vector<16x128xi1> to vector<16x128xi32>
    %76 = arith.subi %72, %70 : vector<16x128xi32>
    %77 = arith.cmpi ult, %72, %70 : vector<16x128xi32>
    %78 = arith.extui %77 : vector<16x128xi1> to vector<16x128xi32>
    %79 = arith.ori %75, %78 : vector<16x128xi32>
    %80 = arith.subi %68, %79 : vector<16x128xi32>
    %81 = arith.cmpi ult, %68, %79 : vector<16x128xi32>
    %82 = arith.extui %81 : vector<16x128xi1> to vector<16x128xi32>
    %83 = arith.subi %76, %82 : vector<16x128xi32>
    %84 = arith.addi %42, %80 : vector<16x128xi32>
    %85 = arith.cmpi ult, %84, %42 : vector<16x128xi32>
    %86 = arith.extui %85 : vector<16x128xi1> to vector<16x128xi32>
    %87 = arith.addi %40, %83 : vector<16x128xi32>
    %88 = arith.cmpi ult, %87, %40 : vector<16x128xi32>
    %89 = arith.extui %88 : vector<16x128xi1> to vector<16x128xi32>
    %90 = arith.addi %87, %86 : vector<16x128xi32>
    %91 = arith.cmpi ult, %90, %86 : vector<16x128xi32>
    %92 = arith.extui %91 : vector<16x128xi1> to vector<16x128xi32>
    %93 = arith.ori %89, %92 : vector<16x128xi32>
    %94 = arith.addi %84, %93 : vector<16x128xi32>
    %95 = arith.cmpi ult, %94, %84 : vector<16x128xi32>
    %96 = arith.extui %95 : vector<16x128xi1> to vector<16x128xi32>
    %97 = arith.addi %90, %96 : vector<16x128xi32>
    %c-1_i32_48 = arith.constant -1 : i32
    %98 = vector.broadcast %c-1_i32_48 : i32 to vector<16x128xi32>
    %99 = arith.cmpi eq, %97, %98 : vector<16x128xi32>
    %c-1_i32_49 = arith.constant -1 : i32
    %100 = vector.broadcast %c-1_i32_49 : i32 to vector<16x128xi32>
    %101 = arith.cmpi eq, %94, %100 : vector<16x128xi32>
    %102 = arith.andi %99, %101 : vector<16x128xi1>
    %c0_i32_50 = arith.constant 0 : i32
    %103 = vector.broadcast %c0_i32_50 : i32 to vector<16x128xi32>
    %104 = arith.select %102, %103, %97 : vector<16x128xi1>, vector<16x128xi32>
    %c0_i32_51 = arith.constant 0 : i32
    %105 = vector.broadcast %c0_i32_51 : i32 to vector<16x128xi32>
    %106 = arith.select %102, %105, %94 : vector<16x128xi1>, vector<16x128xi32>
    %107 = arith.addi %38, %106 : vector<16x128xi32>
    %108 = arith.cmpi ult, %107, %38 : vector<16x128xi32>
    %109 = arith.extui %108 : vector<16x128xi1> to vector<16x128xi32>
    %110 = arith.addi %36, %104 : vector<16x128xi32>
    %111 = arith.cmpi ult, %110, %36 : vector<16x128xi32>
    %112 = arith.extui %111 : vector<16x128xi1> to vector<16x128xi32>
    %113 = arith.addi %110, %109 : vector<16x128xi32>
    %114 = arith.cmpi ult, %113, %109 : vector<16x128xi32>
    %115 = arith.extui %114 : vector<16x128xi1> to vector<16x128xi32>
    %116 = arith.ori %112, %115 : vector<16x128xi32>
    %117 = arith.addi %107, %116 : vector<16x128xi32>
    %118 = arith.cmpi ult, %117, %107 : vector<16x128xi32>
    %119 = arith.extui %118 : vector<16x128xi1> to vector<16x128xi32>
    %120 = arith.addi %113, %119 : vector<16x128xi32>
    %c-1_i32_52 = arith.constant -1 : i32
    %121 = vector.broadcast %c-1_i32_52 : i32 to vector<16x128xi32>
    %122 = arith.cmpi eq, %120, %121 : vector<16x128xi32>
    %c-1_i32_53 = arith.constant -1 : i32
    %123 = vector.broadcast %c-1_i32_53 : i32 to vector<16x128xi32>
    %124 = arith.cmpi eq, %117, %123 : vector<16x128xi32>
    %125 = arith.andi %122, %124 : vector<16x128xi1>
    %c0_i32_54 = arith.constant 0 : i32
    %126 = vector.broadcast %c0_i32_54 : i32 to vector<16x128xi32>
    %127 = arith.select %125, %126, %120 : vector<16x128xi1>, vector<16x128xi32>
    %c0_i32_55 = arith.constant 0 : i32
    %128 = vector.broadcast %c0_i32_55 : i32 to vector<16x128xi32>
    %129 = arith.select %125, %128, %117 : vector<16x128xi1>, vector<16x128xi32>
    %c1_i32_56 = arith.constant 1 : i32
    %130 = vector.broadcast %c1_i32_56 : i32 to vector<16x128xi32>
    %131 = arith.subi %129, %130 : vector<16x128xi32>
    %c1_i32_57 = arith.constant 1 : i32
    %132 = vector.broadcast %c1_i32_57 : i32 to vector<16x128xi32>
    %133 = arith.cmpi ult, %129, %132 : vector<16x128xi32>
    %134 = arith.extui %133 : vector<16x128xi1> to vector<16x128xi32>
    %135 = arith.subi %127, %134 : vector<16x128xi32>
    %136 = arith.cmpi ult, %127, %134 : vector<16x128xi32>
    %137 = arith.extui %136 : vector<16x128xi1> to vector<16x128xi32>
    %138 = arith.subi %131, %137 : vector<16x128xi32>
    %139 = arith.cmpi ult, %131, %137 : vector<16x128xi32>
    %140 = arith.extui %139 : vector<16x128xi1> to vector<16x128xi32>
    %141 = arith.subi %135, %140 : vector<16x128xi32>
    %142 = arith.subi %138, %24 : vector<16x128xi32>
    %143 = arith.cmpi ult, %138, %24 : vector<16x128xi32>
    %144 = arith.extui %143 : vector<16x128xi1> to vector<16x128xi32>
    %145 = arith.subi %141, %144 : vector<16x128xi32>
    %146 = arith.cmpi ult, %141, %144 : vector<16x128xi32>
    %147 = arith.extui %146 : vector<16x128xi1> to vector<16x128xi32>
    %148 = arith.subi %142, %147 : vector<16x128xi32>
    %149 = arith.cmpi ult, %142, %147 : vector<16x128xi32>
    %150 = arith.extui %149 : vector<16x128xi1> to vector<16x128xi32>
    %151 = arith.subi %145, %150 : vector<16x128xi32>
    %152 = arith.addi %148, %34 : vector<16x128xi32>
    %153 = arith.cmpi ult, %152, %148 : vector<16x128xi32>
    %154 = arith.extui %153 : vector<16x128xi1> to vector<16x128xi32>
    %155 = arith.addi %151, %154 : vector<16x128xi32>
    %156 = arith.cmpi ult, %155, %154 : vector<16x128xi32>
    %157 = arith.extui %156 : vector<16x128xi1> to vector<16x128xi32>
    %158 = arith.addi %152, %157 : vector<16x128xi32>
    %159 = arith.cmpi ult, %158, %152 : vector<16x128xi32>
    %160 = arith.extui %159 : vector<16x128xi1> to vector<16x128xi32>
    %161 = arith.addi %155, %160 : vector<16x128xi32>
    %c-1_i32_58 = arith.constant -1 : i32
    %162 = vector.broadcast %c-1_i32_58 : i32 to vector<16x128xi32>
    %163 = arith.cmpi eq, %161, %162 : vector<16x128xi32>
    %c-1_i32_59 = arith.constant -1 : i32
    %164 = vector.broadcast %c-1_i32_59 : i32 to vector<16x128xi32>
    %165 = arith.cmpi eq, %158, %164 : vector<16x128xi32>
    %166 = arith.andi %163, %165 : vector<16x128xi1>
    %c0_i32_60 = arith.constant 0 : i32
    %167 = vector.broadcast %c0_i32_60 : i32 to vector<16x128xi32>
    %168 = arith.select %166, %167, %161 : vector<16x128xi1>, vector<16x128xi32>
    %c0_i32_61 = arith.constant 0 : i32
    %169 = vector.broadcast %c0_i32_61 : i32 to vector<16x128xi32>
    %170 = arith.select %166, %169, %158 : vector<16x128xi1>, vector<16x128xi32>
    %171 = arith.subi %10, %170 : vector<16x128xi32>
    %172 = arith.cmpi ult, %10, %170 : vector<16x128xi32>
    %173 = arith.extui %172 : vector<16x128xi1> to vector<16x128xi32>
    %174 = arith.subi %8, %168 : vector<16x128xi32>
    %175 = arith.cmpi ult, %8, %168 : vector<16x128xi32>
    %176 = arith.extui %175 : vector<16x128xi1> to vector<16x128xi32>
    %177 = arith.subi %174, %173 : vector<16x128xi32>
    %178 = arith.cmpi ult, %174, %173 : vector<16x128xi32>
    %179 = arith.extui %178 : vector<16x128xi1> to vector<16x128xi32>
    %180 = arith.ori %176, %179 : vector<16x128xi32>
    %181 = arith.subi %171, %180 : vector<16x128xi32>
    %182 = arith.cmpi ult, %171, %180 : vector<16x128xi32>
    %183 = arith.extui %182 : vector<16x128xi1> to vector<16x128xi32>
    %184 = arith.subi %177, %183 : vector<16x128xi32>
    %c4 = arith.constant 4 : index
    %c0_62 = arith.constant 0 : index
    %c0_63 = arith.constant 0 : index
    %c0_64 = arith.constant 0 : index
    %185 = vector.load %arg3[%c4, %c0_62, %c0_63, %c0_64] : memref<18x2x16x128xi32, #tpu.memory_space<vmem>>, vector<1x1x16x128xi32>
    %186 = vector.shape_cast %185 : vector<1x1x16x128xi32> to vector<16x128xi32>
    %c4_65 = arith.constant 4 : index
    %c1_66 = arith.constant 1 : index
    %c0_67 = arith.constant 0 : index
    %c0_68 = arith.constant 0 : index
    %187 = vector.load %arg3[%c4_65, %c1_66, %c0_67, %c0_68] : memref<18x2x16x128xi32, #tpu.memory_space<vmem>>, vector<1x1x16x128xi32>
    %188 = vector.shape_cast %187 : vector<1x1x16x128xi32> to vector<16x128xi32>
    %c5 = arith.constant 5 : index
    %c0_69 = arith.constant 0 : index
    %c0_70 = arith.constant 0 : index
    %c0_71 = arith.constant 0 : index
    %189 = vector.load %arg3[%c5, %c0_69, %c0_70, %c0_71] : memref<18x2x16x128xi32, #tpu.memory_space<vmem>>, vector<1x1x16x128xi32>
    %190 = vector.shape_cast %189 : vector<1x1x16x128xi32> to vector<16x128xi32>
    %c5_72 = arith.constant 5 : index
    %c1_73 = arith.constant 1 : index
    %c0_74 = arith.constant 0 : index
    %c0_75 = arith.constant 0 : index
    %191 = vector.load %arg3[%c5_72, %c1_73, %c0_74, %c0_75] : memref<18x2x16x128xi32, #tpu.memory_space<vmem>>, vector<1x1x16x128xi32>
    %192 = vector.shape_cast %191 : vector<1x1x16x128xi32> to vector<16x128xi32>
    %c6 = arith.constant 6 : index
    %c0_76 = arith.constant 0 : index
    %c0_77 = arith.constant 0 : index
    %c0_78 = arith.constant 0 : index
    %193 = vector.load %arg3[%c6, %c0_76, %c0_77, %c0_78] : memref<18x2x16x128xi32, #tpu.memory_space<vmem>>, vector<1x1x16x128xi32>
    %194 = vector.shape_cast %193 : vector<1x1x16x128xi32> to vector<16x128xi32>
    %c6_79 = arith.constant 6 : index
    %c1_80 = arith.constant 1 : index
    %c0_81 = arith.constant 0 : index
    %c0_82 = arith.constant 0 : index
    %195 = vector.load %arg3[%c6_79, %c1_80, %c0_81, %c0_82] : memref<18x2x16x128xi32, #tpu.memory_space<vmem>>, vector<1x1x16x128xi32>
    %196 = vector.shape_cast %195 : vector<1x1x16x128xi32> to vector<16x128xi32>
    %c7 = arith.constant 7 : index
    %c0_83 = arith.constant 0 : index
    %c0_84 = arith.constant 0 : index
    %c0_85 = arith.constant 0 : index
    %197 = vector.load %arg3[%c7, %c0_83, %c0_84, %c0_85] : memref<18x2x16x128xi32, #tpu.memory_space<vmem>>, vector<1x1x16x128xi32>
    %198 = vector.shape_cast %197 : vector<1x1x16x128xi32> to vector<16x128xi32>
    %c7_86 = arith.constant 7 : index
    %c1_87 = arith.constant 1 : index
    %c0_88 = arith.constant 0 : index
    %c0_89 = arith.constant 0 : index
    %199 = vector.load %arg3[%c7_86, %c1_87, %c0_88, %c0_89] : memref<18x2x16x128xi32, #tpu.memory_space<vmem>>, vector<1x1x16x128xi32>
    %200 = vector.shape_cast %199 : vector<1x1x16x128xi32> to vector<16x128xi32>
    %c1_i32_90 = arith.constant 1 : i32
    %201 = vector.broadcast %c1_i32_90 : i32 to vector<16x128xi32>
    %202 = arith.shli %184, %201 : vector<16x128xi32>
    %c31_i32_91 = arith.constant 31 : i32
    %203 = vector.broadcast %c31_i32_91 : i32 to vector<16x128xi32>
    %204 = arith.shrui %181, %203 : vector<16x128xi32>
    %205 = arith.ori %202, %204 : vector<16x128xi32>
    %c1_i32_92 = arith.constant 1 : i32
    %206 = vector.broadcast %c1_i32_92 : i32 to vector<16x128xi32>
    %207 = arith.shli %181, %206 : vector<16x128xi32>
    %c31_i32_93 = arith.constant 31 : i32
    %208 = vector.broadcast %c31_i32_93 : i32 to vector<16x128xi32>
    %209 = arith.shrui %184, %208 : vector<16x128xi32>
    %210 = arith.ori %207, %209 : vector<16x128xi32>
    %c-1_i32_94 = arith.constant -1 : i32
    %211 = vector.broadcast %c-1_i32_94 : i32 to vector<16x128xi32>
    %212 = arith.cmpi eq, %205, %211 : vector<16x128xi32>
    %c-1_i32_95 = arith.constant -1 : i32
    %213 = vector.broadcast %c-1_i32_95 : i32 to vector<16x128xi32>
    %214 = arith.cmpi eq, %210, %213 : vector<16x128xi32>
    %215 = arith.andi %212, %214 : vector<16x128xi1>
    %c0_i32_96 = arith.constant 0 : i32
    %216 = vector.broadcast %c0_i32_96 : i32 to vector<16x128xi32>
    %217 = arith.select %215, %216, %205 : vector<16x128xi1>, vector<16x128xi32>
    %c0_i32_97 = arith.constant 0 : i32
    %218 = vector.broadcast %c0_i32_97 : i32 to vector<16x128xi32>
    %219 = arith.select %215, %218, %210 : vector<16x128xi1>, vector<16x128xi32>
    %220 = arith.addi %188, %219 : vector<16x128xi32>
    %221 = arith.cmpi ult, %220, %188 : vector<16x128xi32>
    %222 = arith.extui %221 : vector<16x128xi1> to vector<16x128xi32>
    %223 = arith.addi %186, %217 : vector<16x128xi32>
    %224 = arith.cmpi ult, %223, %186 : vector<16x128xi32>
    %225 = arith.extui %224 : vector<16x128xi1> to vector<16x128xi32>
    %226 = arith.addi %223, %222 : vector<16x128xi32>
    %227 = arith.cmpi ult, %226, %222 : vector<16x128xi32>
    %228 = arith.extui %227 : vector<16x128xi1> to vector<16x128xi32>
    %229 = arith.ori %225, %228 : vector<16x128xi32>
    %230 = arith.addi %220, %229 : vector<16x128xi32>
    %231 = arith.cmpi ult, %230, %220 : vector<16x128xi32>
    %232 = arith.extui %231 : vector<16x128xi1> to vector<16x128xi32>
    %233 = arith.addi %226, %232 : vector<16x128xi32>
    %c-1_i32_98 = arith.constant -1 : i32
    %234 = vector.broadcast %c-1_i32_98 : i32 to vector<16x128xi32>
    %235 = arith.cmpi eq, %233, %234 : vector<16x128xi32>
    %c-1_i32_99 = arith.constant -1 : i32
    %236 = vector.broadcast %c-1_i32_99 : i32 to vector<16x128xi32>
    %237 = arith.cmpi eq, %230, %236 : vector<16x128xi32>
    %238 = arith.andi %235, %237 : vector<16x128xi1>
    %c0_i32_100 = arith.constant 0 : i32
    %239 = vector.broadcast %c0_i32_100 : i32 to vector<16x128xi32>
    %240 = arith.select %238, %239, %233 : vector<16x128xi1>, vector<16x128xi32>
    %c0_i32_101 = arith.constant 0 : i32
    %241 = vector.broadcast %c0_i32_101 : i32 to vector<16x128xi32>
    %242 = arith.select %238, %241, %230 : vector<16x128xi1>, vector<16x128xi32>
    %243 = arith.addi %242, %196 : vector<16x128xi32>
    %244 = arith.cmpi ult, %243, %242 : vector<16x128xi32>
    %245 = arith.extui %244 : vector<16x128xi1> to vector<16x128xi32>
    %246 = arith.addi %240, %194 : vector<16x128xi32>
    %247 = arith.cmpi ult, %246, %240 : vector<16x128xi32>
    %248 = arith.extui %247 : vector<16x128xi1> to vector<16x128xi32>
    %249 = arith.addi %246, %245 : vector<16x128xi32>
    %250 = arith.cmpi ult, %249, %245 : vector<16x128xi32>
    %251 = arith.extui %250 : vector<16x128xi1> to vector<16x128xi32>
    %252 = arith.ori %248, %251 : vector<16x128xi32>
    %253 = arith.addi %243, %252 : vector<16x128xi32>
    %254 = arith.cmpi ult, %253, %243 : vector<16x128xi32>
    %255 = arith.extui %254 : vector<16x128xi1> to vector<16x128xi32>
    %256 = arith.addi %249, %255 : vector<16x128xi32>
    %c-1_i32_102 = arith.constant -1 : i32
    %257 = vector.broadcast %c-1_i32_102 : i32 to vector<16x128xi32>
    %258 = arith.cmpi eq, %256, %257 : vector<16x128xi32>
    %c-1_i32_103 = arith.constant -1 : i32
    %259 = vector.broadcast %c-1_i32_103 : i32 to vector<16x128xi32>
    %260 = arith.cmpi eq, %253, %259 : vector<16x128xi32>
    %261 = arith.andi %258, %260 : vector<16x128xi1>
    %c0_i32_104 = arith.constant 0 : i32
    %262 = vector.broadcast %c0_i32_104 : i32 to vector<16x128xi32>
    %263 = arith.select %261, %262, %253 : vector<16x128xi1>, vector<16x128xi32>
    %c0_i32_105 = arith.constant 0 : i32
    %264 = vector.broadcast %c0_i32_105 : i32 to vector<16x128xi32>
    %265 = arith.cmpi ne, %6, %264 : vector<16x128xi32>
    %c0_i32_106 = arith.constant 0 : i32
    %266 = vector.broadcast %c0_i32_106 : i32 to vector<16x128xi32>
    %267 = arith.select %265, %198, %266 : vector<16x128xi1>, vector<16x128xi32>
    %c0_i32_107 = arith.constant 0 : i32
    %268 = vector.broadcast %c0_i32_107 : i32 to vector<16x128xi32>
    %269 = arith.select %265, %200, %268 : vector<16x128xi1>, vector<16x128xi32>
    %c1_i32_108 = arith.constant 1 : i32
    %270 = vector.broadcast %c1_i32_108 : i32 to vector<16x128xi32>
    %271 = arith.shli %267, %270 : vector<16x128xi32>
    %c31_i32_109 = arith.constant 31 : i32
    %272 = vector.broadcast %c31_i32_109 : i32 to vector<16x128xi32>
    %273 = arith.shrui %269, %272 : vector<16x128xi32>
    %274 = arith.ori %271, %273 : vector<16x128xi32>
    %c1_i32_110 = arith.constant 1 : i32
    %275 = vector.broadcast %c1_i32_110 : i32 to vector<16x128xi32>
    %276 = arith.shli %269, %275 : vector<16x128xi32>
    %277 = arith.subi %200, %276 : vector<16x128xi32>
    %278 = arith.cmpi ult, %200, %276 : vector<16x128xi32>
    %279 = arith.extui %278 : vector<16x128xi1> to vector<16x128xi32>
    %280 = arith.subi %198, %274 : vector<16x128xi32>
    %281 = arith.subi %280, %279 : vector<16x128xi32>
    %c1_i32_111 = arith.constant 1 : i32
    %282 = vector.broadcast %c1_i32_111 : i32 to vector<16x128xi32>
    %283 = arith.andi %263, %282 : vector<16x128xi32>
    %c0_i32_112 = arith.constant 0 : i32
    %284 = vector.broadcast %c0_i32_112 : i32 to vector<16x128xi32>
    %285 = arith.cmpi ne, %283, %284 : vector<16x128xi32>
    %c0_i32_113 = arith.constant 0 : i32
    %286 = vector.broadcast %c0_i32_113 : i32 to vector<16x128xi32>
    %287 = arith.select %285, %190, %286 : vector<16x128xi1>, vector<16x128xi32>
    %c0_i32_114 = arith.constant 0 : i32
    %288 = vector.broadcast %c0_i32_114 : i32 to vector<16x128xi32>
    %289 = arith.select %285, %192, %288 : vector<16x128xi1>, vector<16x128xi32>
    %c1_i32_115 = arith.constant 1 : i32
    %290 = vector.broadcast %c1_i32_115 : i32 to vector<16x128xi32>
    %291 = arith.shli %287, %290 : vector<16x128xi32>
    %c31_i32_116 = arith.constant 31 : i32
    %292 = vector.broadcast %c31_i32_116 : i32 to vector<16x128xi32>
    %293 = arith.shrui %289, %292 : vector<16x128xi32>
    %294 = arith.ori %291, %293 : vector<16x128xi32>
    %c1_i32_117 = arith.constant 1 : i32
    %295 = vector.broadcast %c1_i32_117 : i32 to vector<16x128xi32>
    %296 = arith.shli %289, %295 : vector<16x128xi32>
    %297 = arith.subi %192, %296 : vector<16x128xi32>
    %298 = arith.cmpi ult, %192, %296 : vector<16x128xi32>
    %299 = arith.extui %298 : vector<16x128xi1> to vector<16x128xi32>
    %300 = arith.subi %190, %294 : vector<16x128xi32>
    %301 = arith.subi %300, %299 : vector<16x128xi32>
    %c8 = arith.constant 8 : index
    %c0_118 = arith.constant 0 : index
    %c0_119 = arith.constant 0 : index
    %c0_120 = arith.constant 0 : index
    %302 = vector.load %arg3[%c8, %c0_118, %c0_119, %c0_120] : memref<18x2x16x128xi32, #tpu.memory_space<vmem>>, vector<1x1x16x128xi32>
    %303 = vector.shape_cast %302 : vector<1x1x16x128xi32> to vector<16x128xi32>
    %c8_121 = arith.constant 8 : index
    %c1_122 = arith.constant 1 : index
    %c0_123 = arith.constant 0 : index
    %c0_124 = arith.constant 0 : index
    %304 = vector.load %arg3[%c8_121, %c1_122, %c0_123, %c0_124] : memref<18x2x16x128xi32, #tpu.memory_space<vmem>>, vector<1x1x16x128xi32>
    %305 = vector.shape_cast %304 : vector<1x1x16x128xi32> to vector<16x128xi32>
    %c9 = arith.constant 9 : index
    %c0_125 = arith.constant 0 : index
    %c0_126 = arith.constant 0 : index
    %c0_127 = arith.constant 0 : index
    %306 = vector.load %arg3[%c9, %c0_125, %c0_126, %c0_127] : memref<18x2x16x128xi32, #tpu.memory_space<vmem>>, vector<1x1x16x128xi32>
    %307 = vector.shape_cast %306 : vector<1x1x16x128xi32> to vector<16x128xi32>
    %c9_128 = arith.constant 9 : index
    %c1_129 = arith.constant 1 : index
    %c0_130 = arith.constant 0 : index
    %c0_131 = arith.constant 0 : index
    %308 = vector.load %arg3[%c9_128, %c1_129, %c0_130, %c0_131] : memref<18x2x16x128xi32, #tpu.memory_space<vmem>>, vector<1x1x16x128xi32>
    %309 = vector.shape_cast %308 : vector<1x1x16x128xi32> to vector<16x128xi32>
    %c10 = arith.constant 10 : index
    %c0_132 = arith.constant 0 : index
    %c0_133 = arith.constant 0 : index
    %c0_134 = arith.constant 0 : index
    %310 = vector.load %arg3[%c10, %c0_132, %c0_133, %c0_134] : memref<18x2x16x128xi32, #tpu.memory_space<vmem>>, vector<1x1x16x128xi32>
    %311 = vector.shape_cast %310 : vector<1x1x16x128xi32> to vector<16x128xi32>
    %c10_135 = arith.constant 10 : index
    %c1_136 = arith.constant 1 : index
    %c0_137 = arith.constant 0 : index
    %c0_138 = arith.constant 0 : index
    %312 = vector.load %arg3[%c10_135, %c1_136, %c0_137, %c0_138] : memref<18x2x16x128xi32, #tpu.memory_space<vmem>>, vector<1x1x16x128xi32>
    %313 = vector.shape_cast %312 : vector<1x1x16x128xi32> to vector<16x128xi32>
    %c11 = arith.constant 11 : index
    %c0_139 = arith.constant 0 : index
    %c0_140 = arith.constant 0 : index
    %c0_141 = arith.constant 0 : index
    %314 = vector.load %arg3[%c11, %c0_139, %c0_140, %c0_141] : memref<18x2x16x128xi32, #tpu.memory_space<vmem>>, vector<1x1x16x128xi32>
    %315 = vector.shape_cast %314 : vector<1x1x16x128xi32> to vector<16x128xi32>
    %c11_142 = arith.constant 11 : index
    %c1_143 = arith.constant 1 : index
    %c0_144 = arith.constant 0 : index
    %c0_145 = arith.constant 0 : index
    %316 = vector.load %arg3[%c11_142, %c1_143, %c0_144, %c0_145] : memref<18x2x16x128xi32, #tpu.memory_space<vmem>>, vector<1x1x16x128xi32>
    %317 = vector.shape_cast %316 : vector<1x1x16x128xi32> to vector<16x128xi32>
    %c12 = arith.constant 12 : index
    %c0_146 = arith.constant 0 : index
    %c0_147 = arith.constant 0 : index
    %c0_148 = arith.constant 0 : index
    %318 = vector.load %arg3[%c12, %c0_146, %c0_147, %c0_148] : memref<18x2x16x128xi32, #tpu.memory_space<vmem>>, vector<1x1x16x128xi32>
    %319 = vector.shape_cast %318 : vector<1x1x16x128xi32> to vector<16x128xi32>
    %c12_149 = arith.constant 12 : index
    %c1_150 = arith.constant 1 : index
    %c0_151 = arith.constant 0 : index
    %c0_152 = arith.constant 0 : index
    %320 = vector.load %arg3[%c12_149, %c1_150, %c0_151, %c0_152] : memref<18x2x16x128xi32, #tpu.memory_space<vmem>>, vector<1x1x16x128xi32>
    %321 = vector.shape_cast %320 : vector<1x1x16x128xi32> to vector<16x128xi32>
    %322 = arith.subi %277, %305 : vector<16x128xi32>
    %323 = arith.cmpi ult, %277, %305 : vector<16x128xi32>
    %324 = arith.extui %323 : vector<16x128xi1> to vector<16x128xi32>
    %325 = arith.subi %281, %303 : vector<16x128xi32>
    %326 = arith.subi %325, %324 : vector<16x128xi32>
    %327 = arith.addi %317, %322 : vector<16x128xi32>
    %328 = arith.cmpi ult, %327, %317 : vector<16x128xi32>
    %329 = arith.extui %328 : vector<16x128xi1> to vector<16x128xi32>
    %330 = arith.addi %315, %326 : vector<16x128xi32>
    %331 = arith.addi %330, %329 : vector<16x128xi32>
    %332 = arith.subi %297, %309 : vector<16x128xi32>
    %333 = arith.cmpi ult, %297, %309 : vector<16x128xi32>
    %334 = arith.extui %333 : vector<16x128xi1> to vector<16x128xi32>
    %335 = arith.subi %301, %307 : vector<16x128xi32>
    %336 = arith.subi %335, %334 : vector<16x128xi32>
    %337 = arith.addi %321, %332 : vector<16x128xi32>
    %338 = arith.cmpi ult, %337, %321 : vector<16x128xi32>
    %339 = arith.extui %338 : vector<16x128xi1> to vector<16x128xi32>
    %340 = arith.addi %319, %336 : vector<16x128xi32>
    %341 = arith.addi %340, %339 : vector<16x128xi32>
    %c65535_i32 = arith.constant 65535 : i32
    %342 = vector.broadcast %c65535_i32 : i32 to vector<16x128xi32>
    %343 = arith.andi %277, %342 : vector<16x128xi32>
    %c16_i32 = arith.constant 16 : i32
    %344 = vector.broadcast %c16_i32 : i32 to vector<16x128xi32>
    %345 = arith.shrui %277, %344 : vector<16x128xi32>
    %c65535_i32_153 = arith.constant 65535 : i32
    %346 = vector.broadcast %c65535_i32_153 : i32 to vector<16x128xi32>
    %347 = arith.andi %337, %346 : vector<16x128xi32>
    %c16_i32_154 = arith.constant 16 : i32
    %348 = vector.broadcast %c16_i32_154 : i32 to vector<16x128xi32>
    %349 = arith.shrui %337, %348 : vector<16x128xi32>
    %350 = arith.muli %343, %347 : vector<16x128xi32>
    %351 = arith.muli %343, %349 : vector<16x128xi32>
    %352 = arith.muli %345, %347 : vector<16x128xi32>
    %353 = arith.muli %345, %349 : vector<16x128xi32>
    %354 = arith.addi %351, %352 : vector<16x128xi32>
    %355 = arith.cmpi ult, %354, %351 : vector<16x128xi32>
    %356 = arith.extui %355 : vector<16x128xi1> to vector<16x128xi32>
    %c16_i32_155 = arith.constant 16 : i32
    %357 = vector.broadcast %c16_i32_155 : i32 to vector<16x128xi32>
    %358 = arith.shli %354, %357 : vector<16x128xi32>
    %359 = arith.addi %350, %358 : vector<16x128xi32>
    %360 = arith.cmpi ult, %359, %350 : vector<16x128xi32>
    %361 = arith.extui %360 : vector<16x128xi1> to vector<16x128xi32>
    %c16_i32_156 = arith.constant 16 : i32
    %362 = vector.broadcast %c16_i32_156 : i32 to vector<16x128xi32>
    %363 = arith.shrui %354, %362 : vector<16x128xi32>
    %364 = arith.addi %353, %363 : vector<16x128xi32>
    %c16_i32_157 = arith.constant 16 : i32
    %365 = vector.broadcast %c16_i32_157 : i32 to vector<16x128xi32>
    %366 = arith.shli %356, %365 : vector<16x128xi32>
    %367 = arith.addi %364, %366 : vector<16x128xi32>
    %368 = arith.addi %367, %361 : vector<16x128xi32>
    %369 = arith.muli %277, %341 : vector<16x128xi32>
    %370 = arith.addi %368, %369 : vector<16x128xi32>
    %371 = arith.muli %281, %337 : vector<16x128xi32>
    %372 = arith.addi %370, %371 : vector<16x128xi32>
    %c65535_i32_158 = arith.constant 65535 : i32
    %373 = vector.broadcast %c65535_i32_158 : i32 to vector<16x128xi32>
    %374 = arith.andi %297, %373 : vector<16x128xi32>
    %c16_i32_159 = arith.constant 16 : i32
    %375 = vector.broadcast %c16_i32_159 : i32 to vector<16x128xi32>
    %376 = arith.shrui %297, %375 : vector<16x128xi32>
    %c65535_i32_160 = arith.constant 65535 : i32
    %377 = vector.broadcast %c65535_i32_160 : i32 to vector<16x128xi32>
    %378 = arith.andi %327, %377 : vector<16x128xi32>
    %c16_i32_161 = arith.constant 16 : i32
    %379 = vector.broadcast %c16_i32_161 : i32 to vector<16x128xi32>
    %380 = arith.shrui %327, %379 : vector<16x128xi32>
    %381 = arith.muli %374, %378 : vector<16x128xi32>
    %382 = arith.muli %374, %380 : vector<16x128xi32>
    %383 = arith.muli %376, %378 : vector<16x128xi32>
    %384 = arith.muli %376, %380 : vector<16x128xi32>
    %385 = arith.addi %382, %383 : vector<16x128xi32>
    %386 = arith.cmpi ult, %385, %382 : vector<16x128xi32>
    %387 = arith.extui %386 : vector<16x128xi1> to vector<16x128xi32>
    %c16_i32_162 = arith.constant 16 : i32
    %388 = vector.broadcast %c16_i32_162 : i32 to vector<16x128xi32>
    %389 = arith.shli %385, %388 : vector<16x128xi32>
    %390 = arith.addi %381, %389 : vector<16x128xi32>
    %391 = arith.cmpi ult, %390, %381 : vector<16x128xi32>
    %392 = arith.extui %391 : vector<16x128xi1> to vector<16x128xi32>
    %c16_i32_163 = arith.constant 16 : i32
    %393 = vector.broadcast %c16_i32_163 : i32 to vector<16x128xi32>
    %394 = arith.shrui %385, %393 : vector<16x128xi32>
    %395 = arith.addi %384, %394 : vector<16x128xi32>
    %c16_i32_164 = arith.constant 16 : i32
    %396 = vector.broadcast %c16_i32_164 : i32 to vector<16x128xi32>
    %397 = arith.shli %387, %396 : vector<16x128xi32>
    %398 = arith.addi %395, %397 : vector<16x128xi32>
    %399 = arith.addi %398, %392 : vector<16x128xi32>
    %400 = arith.muli %297, %331 : vector<16x128xi32>
    %401 = arith.addi %399, %400 : vector<16x128xi32>
    %402 = arith.muli %301, %327 : vector<16x128xi32>
    %403 = arith.addi %401, %402 : vector<16x128xi32>
    %404 = arith.addi %359, %390 : vector<16x128xi32>
    %405 = arith.cmpi ult, %404, %359 : vector<16x128xi32>
    %406 = arith.extui %405 : vector<16x128xi1> to vector<16x128xi32>
    %407 = arith.addi %372, %403 : vector<16x128xi32>
    %408 = arith.addi %407, %406 : vector<16x128xi32>
    %409 = arith.addi %404, %313 : vector<16x128xi32>
    %410 = arith.cmpi ult, %409, %404 : vector<16x128xi32>
    %411 = arith.extui %410 : vector<16x128xi1> to vector<16x128xi32>
    %412 = arith.addi %408, %311 : vector<16x128xi32>
    %413 = arith.addi %412, %411 : vector<16x128xi32>
    %414 = arith.addi %277, %297 : vector<16x128xi32>
    %415 = arith.cmpi ult, %414, %277 : vector<16x128xi32>
    %416 = arith.extui %415 : vector<16x128xi1> to vector<16x128xi32>
    %417 = arith.addi %281, %301 : vector<16x128xi32>
    %418 = arith.addi %417, %416 : vector<16x128xi32>
    %c1_i32_165 = arith.constant 1 : i32
    %419 = vector.broadcast %c1_i32_165 : i32 to vector<16x128xi32>
    %420 = arith.shli %413, %419 : vector<16x128xi32>
    %c31_i32_166 = arith.constant 31 : i32
    %421 = vector.broadcast %c31_i32_166 : i32 to vector<16x128xi32>
    %422 = arith.shrui %409, %421 : vector<16x128xi32>
    %423 = arith.ori %420, %422 : vector<16x128xi32>
    %c1_i32_167 = arith.constant 1 : i32
    %424 = vector.broadcast %c1_i32_167 : i32 to vector<16x128xi32>
    %425 = arith.shli %409, %424 : vector<16x128xi32>
    %426 = arith.subi %414, %425 : vector<16x128xi32>
    %427 = arith.cmpi ult, %414, %425 : vector<16x128xi32>
    %428 = arith.extui %427 : vector<16x128xi1> to vector<16x128xi32>
    %429 = arith.subi %418, %423 : vector<16x128xi32>
    %430 = arith.subi %429, %428 : vector<16x128xi32>
    %c0_i32_168 = arith.constant 0 : i32
    %431 = vector.broadcast %c0_i32_168 : i32 to vector<16x128xi32>
    %432 = arith.subi %431, %426 : vector<16x128xi32>
    %c0_i32_169 = arith.constant 0 : i32
    %433 = vector.broadcast %c0_i32_169 : i32 to vector<16x128xi32>
    %434 = arith.cmpi ne, %426, %433 : vector<16x128xi32>
    %435 = arith.extui %434 : vector<16x128xi1> to vector<16x128xi32>
    %c0_i32_170 = arith.constant 0 : i32
    %436 = vector.broadcast %c0_i32_170 : i32 to vector<16x128xi32>
    %437 = arith.subi %436, %430 : vector<16x128xi32>
    %438 = arith.subi %437, %435 : vector<16x128xi32>
    %c0_171 = arith.constant 0 : index
    %c0_172 = arith.constant 0 : index
    %c0_173 = arith.constant 0 : index
    %439 = vector.load %arg1[%c0_171, %c0_172, %c0_173] : memref<2x16x128xi32, #tpu.memory_space<vmem>>, vector<1x16x128xi32>
    %440 = vector.shape_cast %439 : vector<1x16x128xi32> to vector<16x128xi32>
    %c1_174 = arith.constant 1 : index
    %c0_175 = arith.constant 0 : index
    %c0_176 = arith.constant 0 : index
    %441 = vector.load %arg1[%c1_174, %c0_175, %c0_176] : memref<2x16x128xi32, #tpu.memory_space<vmem>>, vector<1x16x128xi32>
    %442 = vector.shape_cast %441 : vector<1x16x128xi32> to vector<16x128xi32>
    %c13 = arith.constant 13 : index
    %c0_177 = arith.constant 0 : index
    %c0_178 = arith.constant 0 : index
    %c0_179 = arith.constant 0 : index
    %443 = vector.load %arg3[%c13, %c0_177, %c0_178, %c0_179] : memref<18x2x16x128xi32, #tpu.memory_space<vmem>>, vector<1x1x16x128xi32>
    %444 = vector.shape_cast %443 : vector<1x1x16x128xi32> to vector<16x128xi32>
    %c13_180 = arith.constant 13 : index
    %c1_181 = arith.constant 1 : index
    %c0_182 = arith.constant 0 : index
    %c0_183 = arith.constant 0 : index
    %445 = vector.load %arg3[%c13_180, %c1_181, %c0_182, %c0_183] : memref<18x2x16x128xi32, #tpu.memory_space<vmem>>, vector<1x1x16x128xi32>
    %446 = vector.shape_cast %445 : vector<1x1x16x128xi32> to vector<16x128xi32>
    %c14 = arith.constant 14 : index
    %c0_184 = arith.constant 0 : index
    %c0_185 = arith.constant 0 : index
    %c0_186 = arith.constant 0 : index
    %447 = vector.load %arg3[%c14, %c0_184, %c0_185, %c0_186] : memref<18x2x16x128xi32, #tpu.memory_space<vmem>>, vector<1x1x16x128xi32>
    %448 = vector.shape_cast %447 : vector<1x1x16x128xi32> to vector<16x128xi32>
    %c14_187 = arith.constant 14 : index
    %c1_188 = arith.constant 1 : index
    %c0_189 = arith.constant 0 : index
    %c0_190 = arith.constant 0 : index
    %449 = vector.load %arg3[%c14_187, %c1_188, %c0_189, %c0_190] : memref<18x2x16x128xi32, #tpu.memory_space<vmem>>, vector<1x1x16x128xi32>
    %450 = vector.shape_cast %449 : vector<1x1x16x128xi32> to vector<16x128xi32>
    %c15 = arith.constant 15 : index
    %c0_191 = arith.constant 0 : index
    %c0_192 = arith.constant 0 : index
    %c0_193 = arith.constant 0 : index
    %451 = vector.load %arg3[%c15, %c0_191, %c0_192, %c0_193] : memref<18x2x16x128xi32, #tpu.memory_space<vmem>>, vector<1x1x16x128xi32>
    %452 = vector.shape_cast %451 : vector<1x1x16x128xi32> to vector<16x128xi32>
    %c15_194 = arith.constant 15 : index
    %c1_195 = arith.constant 1 : index
    %c0_196 = arith.constant 0 : index
    %c0_197 = arith.constant 0 : index
    %453 = vector.load %arg3[%c15_194, %c1_195, %c0_196, %c0_197] : memref<18x2x16x128xi32, #tpu.memory_space<vmem>>, vector<1x1x16x128xi32>
    %454 = vector.shape_cast %453 : vector<1x1x16x128xi32> to vector<16x128xi32>
    %c16 = arith.constant 16 : index
    %c0_198 = arith.constant 0 : index
    %c0_199 = arith.constant 0 : index
    %c0_200 = arith.constant 0 : index
    %455 = vector.load %arg3[%c16, %c0_198, %c0_199, %c0_200] : memref<18x2x16x128xi32, #tpu.memory_space<vmem>>, vector<1x1x16x128xi32>
    %456 = vector.shape_cast %455 : vector<1x1x16x128xi32> to vector<16x128xi32>
    %c16_201 = arith.constant 16 : index
    %c1_202 = arith.constant 1 : index
    %c0_203 = arith.constant 0 : index
    %c0_204 = arith.constant 0 : index
    %457 = vector.load %arg3[%c16_201, %c1_202, %c0_203, %c0_204] : memref<18x2x16x128xi32, #tpu.memory_space<vmem>>, vector<1x1x16x128xi32>
    %458 = vector.shape_cast %457 : vector<1x1x16x128xi32> to vector<16x128xi32>
    %c17 = arith.constant 17 : index
    %c0_205 = arith.constant 0 : index
    %c0_206 = arith.constant 0 : index
    %c0_207 = arith.constant 0 : index
    %459 = vector.load %arg3[%c17, %c0_205, %c0_206, %c0_207] : memref<18x2x16x128xi32, #tpu.memory_space<vmem>>, vector<1x1x16x128xi32>
    %460 = vector.shape_cast %459 : vector<1x1x16x128xi32> to vector<16x128xi32>
    %c17_208 = arith.constant 17 : index
    %c1_209 = arith.constant 1 : index
    %c0_210 = arith.constant 0 : index
    %c0_211 = arith.constant 0 : index
    %461 = vector.load %arg3[%c17_208, %c1_209, %c0_210, %c0_211] : memref<18x2x16x128xi32, #tpu.memory_space<vmem>>, vector<1x1x16x128xi32>
    %462 = vector.shape_cast %461 : vector<1x1x16x128xi32> to vector<16x128xi32>
    %463 = arith.subi %442, %446 : vector<16x128xi32>
    %464 = arith.cmpi ult, %442, %446 : vector<16x128xi32>
    %465 = arith.extui %464 : vector<16x128xi1> to vector<16x128xi32>
    %466 = arith.subi %440, %444 : vector<16x128xi32>
    %467 = arith.subi %466, %465 : vector<16x128xi32>
    %468 = arith.addi %458, %463 : vector<16x128xi32>
    %469 = arith.cmpi ult, %468, %458 : vector<16x128xi32>
    %470 = arith.extui %469 : vector<16x128xi1> to vector<16x128xi32>
    %471 = arith.addi %456, %467 : vector<16x128xi32>
    %472 = arith.addi %471, %470 : vector<16x128xi32>
    %473 = arith.subi %432, %450 : vector<16x128xi32>
    %474 = arith.cmpi ult, %432, %450 : vector<16x128xi32>
    %475 = arith.extui %474 : vector<16x128xi1> to vector<16x128xi32>
    %476 = arith.subi %438, %448 : vector<16x128xi32>
    %477 = arith.subi %476, %475 : vector<16x128xi32>
    %478 = arith.addi %462, %473 : vector<16x128xi32>
    %479 = arith.cmpi ult, %478, %462 : vector<16x128xi32>
    %480 = arith.extui %479 : vector<16x128xi1> to vector<16x128xi32>
    %481 = arith.addi %460, %477 : vector<16x128xi32>
    %482 = arith.addi %481, %480 : vector<16x128xi32>
    %c65535_i32_212 = arith.constant 65535 : i32
    %483 = vector.broadcast %c65535_i32_212 : i32 to vector<16x128xi32>
    %484 = arith.andi %442, %483 : vector<16x128xi32>
    %c16_i32_213 = arith.constant 16 : i32
    %485 = vector.broadcast %c16_i32_213 : i32 to vector<16x128xi32>
    %486 = arith.shrui %442, %485 : vector<16x128xi32>
    %c65535_i32_214 = arith.constant 65535 : i32
    %487 = vector.broadcast %c65535_i32_214 : i32 to vector<16x128xi32>
    %488 = arith.andi %478, %487 : vector<16x128xi32>
    %c16_i32_215 = arith.constant 16 : i32
    %489 = vector.broadcast %c16_i32_215 : i32 to vector<16x128xi32>
    %490 = arith.shrui %478, %489 : vector<16x128xi32>
    %491 = arith.muli %484, %488 : vector<16x128xi32>
    %492 = arith.muli %484, %490 : vector<16x128xi32>
    %493 = arith.muli %486, %488 : vector<16x128xi32>
    %494 = arith.muli %486, %490 : vector<16x128xi32>
    %495 = arith.addi %492, %493 : vector<16x128xi32>
    %496 = arith.cmpi ult, %495, %492 : vector<16x128xi32>
    %497 = arith.extui %496 : vector<16x128xi1> to vector<16x128xi32>
    %c16_i32_216 = arith.constant 16 : i32
    %498 = vector.broadcast %c16_i32_216 : i32 to vector<16x128xi32>
    %499 = arith.shli %495, %498 : vector<16x128xi32>
    %500 = arith.addi %491, %499 : vector<16x128xi32>
    %501 = arith.cmpi ult, %500, %491 : vector<16x128xi32>
    %502 = arith.extui %501 : vector<16x128xi1> to vector<16x128xi32>
    %c16_i32_217 = arith.constant 16 : i32
    %503 = vector.broadcast %c16_i32_217 : i32 to vector<16x128xi32>
    %504 = arith.shrui %495, %503 : vector<16x128xi32>
    %505 = arith.addi %494, %504 : vector<16x128xi32>
    %c16_i32_218 = arith.constant 16 : i32
    %506 = vector.broadcast %c16_i32_218 : i32 to vector<16x128xi32>
    %507 = arith.shli %497, %506 : vector<16x128xi32>
    %508 = arith.addi %505, %507 : vector<16x128xi32>
    %509 = arith.addi %508, %502 : vector<16x128xi32>
    %510 = arith.muli %442, %482 : vector<16x128xi32>
    %511 = arith.addi %509, %510 : vector<16x128xi32>
    %512 = arith.muli %440, %478 : vector<16x128xi32>
    %513 = arith.addi %511, %512 : vector<16x128xi32>
    %c65535_i32_219 = arith.constant 65535 : i32
    %514 = vector.broadcast %c65535_i32_219 : i32 to vector<16x128xi32>
    %515 = arith.andi %432, %514 : vector<16x128xi32>
    %c16_i32_220 = arith.constant 16 : i32
    %516 = vector.broadcast %c16_i32_220 : i32 to vector<16x128xi32>
    %517 = arith.shrui %432, %516 : vector<16x128xi32>
    %c65535_i32_221 = arith.constant 65535 : i32
    %518 = vector.broadcast %c65535_i32_221 : i32 to vector<16x128xi32>
    %519 = arith.andi %468, %518 : vector<16x128xi32>
    %c16_i32_222 = arith.constant 16 : i32
    %520 = vector.broadcast %c16_i32_222 : i32 to vector<16x128xi32>
    %521 = arith.shrui %468, %520 : vector<16x128xi32>
    %522 = arith.muli %515, %519 : vector<16x128xi32>
    %523 = arith.muli %515, %521 : vector<16x128xi32>
    %524 = arith.muli %517, %519 : vector<16x128xi32>
    %525 = arith.muli %517, %521 : vector<16x128xi32>
    %526 = arith.addi %523, %524 : vector<16x128xi32>
    %527 = arith.cmpi ult, %526, %523 : vector<16x128xi32>
    %528 = arith.extui %527 : vector<16x128xi1> to vector<16x128xi32>
    %c16_i32_223 = arith.constant 16 : i32
    %529 = vector.broadcast %c16_i32_223 : i32 to vector<16x128xi32>
    %530 = arith.shli %526, %529 : vector<16x128xi32>
    %531 = arith.addi %522, %530 : vector<16x128xi32>
    %532 = arith.cmpi ult, %531, %522 : vector<16x128xi32>
    %533 = arith.extui %532 : vector<16x128xi1> to vector<16x128xi32>
    %c16_i32_224 = arith.constant 16 : i32
    %534 = vector.broadcast %c16_i32_224 : i32 to vector<16x128xi32>
    %535 = arith.shrui %526, %534 : vector<16x128xi32>
    %536 = arith.addi %525, %535 : vector<16x128xi32>
    %c16_i32_225 = arith.constant 16 : i32
    %537 = vector.broadcast %c16_i32_225 : i32 to vector<16x128xi32>
    %538 = arith.shli %528, %537 : vector<16x128xi32>
    %539 = arith.addi %536, %538 : vector<16x128xi32>
    %540 = arith.addi %539, %533 : vector<16x128xi32>
    %541 = arith.muli %432, %472 : vector<16x128xi32>
    %542 = arith.addi %540, %541 : vector<16x128xi32>
    %543 = arith.muli %438, %468 : vector<16x128xi32>
    %544 = arith.addi %542, %543 : vector<16x128xi32>
    %545 = arith.addi %500, %531 : vector<16x128xi32>
    %546 = arith.cmpi ult, %545, %500 : vector<16x128xi32>
    %547 = arith.extui %546 : vector<16x128xi1> to vector<16x128xi32>
    %548 = arith.addi %513, %544 : vector<16x128xi32>
    %549 = arith.addi %548, %547 : vector<16x128xi32>
    %550 = arith.addi %545, %454 : vector<16x128xi32>
    %551 = arith.cmpi ult, %550, %545 : vector<16x128xi32>
    %552 = arith.extui %551 : vector<16x128xi1> to vector<16x128xi32>
    %553 = arith.addi %549, %452 : vector<16x128xi32>
    %554 = arith.addi %553, %552 : vector<16x128xi32>
    %c0_226 = arith.constant 0 : index
    %c0_227 = arith.constant 0 : index
    %c0_228 = arith.constant 0 : index
    %555 = vector.load %arg4[%c0_226, %c0_227, %c0_228] : memref<2x16x128xi32, #tpu.memory_space<vmem>>, vector<1x16x128xi32>
    %556 = vector.shape_cast %555 : vector<1x16x128xi32> to vector<16x128xi32>
    %557 = vector.shape_cast %554 : vector<16x128xi32> to vector<1x16x128xi32>
    tpu.vector_store %arg4[%c0_226, %c0_227, %c0_228], %557 {strides = array<i32>} : memref<2x16x128xi32, #tpu.memory_space<vmem>>, vector<1x16x128xi32>,
    %c1_229 = arith.constant 1 : index
    %c0_230 = arith.constant 0 : index
    %c0_231 = arith.constant 0 : index
    %558 = vector.load %arg4[%c1_229, %c0_230, %c0_231] : memref<2x16x128xi32, #tpu.memory_space<vmem>>, vector<1x16x128xi32>
    %559 = vector.shape_cast %558 : vector<1x16x128xi32> to vector<16x128xi32>
    %560 = vector.shape_cast %550 : vector<16x128xi32> to vector<1x16x128xi32>
    tpu.vector_store %arg4[%c1_229, %c0_230, %c0_231], %560 {strides = array<i32>} : memref<2x16x128xi32, #tpu.memory_space<vmem>>, vector<1x16x128xi32>,
    return
  }
  func.func @transform_0(%arg0: i32) -> (i32, i32, i32) {
    %c0_i32 = arith.constant 0 : i32
    %c0_i32_0 = arith.constant 0 : i32
    %c0_i32_1 = arith.constant 0 : i32
    return %c0_i32, %arg0, %c0_i32_0 : i32, i32, i32
  }
  func.func @transform_1(%arg0: i32) -> (i32, i32) {
    %c0_i32 = arith.constant 0 : i32
    %c0_i32_0 = arith.constant 0 : i32
    return %arg0, %c0_i32 : i32, i32
  }
  func.func @transform_2(%arg0: i32) -> (i32, i32, i32, i32) {
    %c0_i32 = arith.constant 0 : i32
    %c0_i32_0 = arith.constant 0 : i32
    %c0_i32_1 = arith.constant 0 : i32
    %c0_i32_2 = arith.constant 0 : i32
    return %c0_i32, %c0_i32_0, %arg0, %c0_i32_1 : i32, i32, i32, i32
  }
  func.func @transform_3(%arg0: i32) -> (i32, i32, i32) {
    %c0_i32 = arith.constant 0 : i32
    %c0_i32_0 = arith.constant 0 : i32
    %c0_i32_1 = arith.constant 0 : i32
    return %c0_i32, %arg0, %c0_i32_0 : i32, i32, i32
  }
}

</mosaic_0001>

<llo_original>
// kernel: secure_relu_client.1
$region0: #{secure_relu_client.1}
  #allocation0 [shape = 'u32[]', space=smem, size = 0x4, offset = 0x4, fixed_abs, tag = 'smem constant byte address 0x4 - core index']
  #allocation1 [shape = 'u32[144,128]{1,0:T(1,128)}', space=vmem, size = 0x12000, scoped, tag = 'internal scratch']
  %s0 = inlined_call_operand.vmem [shape: u32[2,16,128], index: 0, kind: input, shape index: {}]
  %s1 = inlined_call_operand.vmem [shape: u32[16,128], index: 1, kind: input, shape index: {}]
  %s2 = inlined_call_operand.vmem [shape: u32[18,2,16,128], index: 2, kind: input, shape index: {}]
  %s3 = inlined_call_operand.vmem [shape: u32[2,16,128], index: 3, kind: output, shape index: {}]
  %s4 = sld [smem:[#allocation0]]
  $region22: #{secure_relu_client.1} parent=0
    _
  %s6 = ssub.s32 1, %s4
  %s7 = scalar_select 0, %s6, %s4
  // Predicated region
  $region2: #{secure_relu_client.1} parent=0 // pred_check
    _
  $region3: #{secure_relu_client.1} parent=0 // pred_check_branch
    %9 = sbr.rel (0) target = $region5
  $region4: #{secure_relu_client.1} parent=0 // pred_region
    _
  $region5: #{secure_relu_client.1} parent=0 // pred_fallthru
    _
  // Predicated region
  $region6: #{secure_relu_client.1} parent=0 // pred_check
    _
  $region7: #{secure_relu_client.1} parent=0 // pred_check_branch
    %11 = sbr.rel (0) target = $region9
  $region8: #{secure_relu_client.1} parent=0 // pred_region
    _
  $region9: #{secure_relu_client.1} parent=0 // pred_fallthru
    _
  // Predicated region
  $region10: #{secure_relu_client.1} parent=0 // pred_check
    _
  $region11: #{secure_relu_client.1} parent=0 // pred_check_branch
    %13 = sbr.rel (0) target = $region13
  $region12: #{secure_relu_client.1} parent=0 // pred_region
    _
  $region13: #{secure_relu_client.1} parent=0 // pred_fallthru
    _
  %v14 = vld [vmem:[%s1] sm:$0xff]
  %v15 = vld [vmem:[%s1 + $0x8] sm:$0xff]
  %v16 = vand.u32 %v14, 1
  %v17 = vand.u32 %v15, 1
  %v18 = vshrl.u32 %v14, 1
  %v19 = vshrl.u32 %v15, 1
  %v20 = vand.u32 %v18, 1
  %v21 = vand.u32 %v19, 1
  %v22 = vld [vmem:[%s0] sm:$0xff]
  %v23 = vld [vmem:[%s0 + $0x8] sm:$0xff]
  %s24 = scalar_lea.vmem %s0, 16
  %v25 = vld [vmem:[%s24] sm:$0xff]
  %v26 = vld [vmem:[%s24 + $0x8] sm:$0xff]
  %v27 = vld [vmem:[%s2] sm:$0xff]
  %v28 = vld [vmem:[%s2 + $0x8] sm:$0xff]
  %s29 = scalar_lea.vmem %s2, 16
  %v30 = vld [vmem:[%s29] sm:$0xff]
  %v31 = vld [vmem:[%s29 + $0x8] sm:$0xff]
  %s32 = scalar_lea.vmem %s2, 32
  %v33 = vld [vmem:[%s32] sm:$0xff]
  %v34 = vld [vmem:[%s32 + $0x8] sm:$0xff]
  %s35 = scalar_lea.vmem %s2, 48
  %v36 = vld [vmem:[%s35] sm:$0xff]
  %v37 = vld [vmem:[%s35 + $0x8] sm:$0xff]
  %vm38 = vcmp.lt.u32.totalorder %v27, %v33
  %vm39 = vcmp.lt.u32.totalorder %v28, %v34
  %vm40 = vcmp.eq.s32.totalorder %v27, %v33
  %vm41 = vcmp.eq.s32.totalorder %v28, %v34
  %vm42 = vcmp.lt.u32.totalorder %v30, %v36
  %vm43 = vcmp.lt.u32.totalorder %v31, %v37
  %vm44 = vmand %vm40, %vm42
  %vm45 = vmand %vm41, %vm43
  %vm46 = vmor %vm38, %vm44
  %vm47 = vmor %vm39, %vm45
  %v48 = vsel %vm46, 1, 0
  %v49 = vsel %vm47, 1, 0
  %v50 = vadd.s32 %v25, %v36
  %v51 = vadd.s32 %v26, %v37
  %vm52 = vcmp.lt.u32.totalorder %v50, %v25
  %vm53 = vcmp.lt.u32.totalorder %v51, %v26
  %v54 = vsel %vm52, 1, 0
  %v55 = vsel %vm53, 1, 0
  %v56 = vadd.s32 %v22, %v33
  %v57 = vadd.s32 %v23, %v34
  %vm58 = vcmp.lt.u32.totalorder %v56, %v22
  %vm59 = vcmp.lt.u32.totalorder %v57, %v23
  %v60 = vadd.s32 %v56, %v54
  %v61 = vadd.s32 %v57, %v55
  %vm62 = vcmp.lt.u32.totalorder %v60, %v54
  %vm63 = vcmp.lt.u32.totalorder %v61, %v55
  %vm64 = vmor %vm58, %vm62
  %vm65 = vmor %vm59, %vm63
  %v66 = vsel %vm64, 1, 0
  %v67 = vsel %vm65, 1, 0
  %s68 = scalar_lea.vmem %s2, 64
  %v69 = vld [vmem:[%s68] sm:$0xff]
  %v70 = vld [vmem:[%s68 + $0x8] sm:$0xff]
  %s71 = scalar_lea.vmem %s2, 80
  %v72 = vld [vmem:[%s71] sm:$0xff]
  %v73 = vld [vmem:[%s71 + $0x8] sm:$0xff]
  %s74 = scalar_lea.vmem %s2, 96
  %v75 = vld [vmem:[%s74] sm:$0xff]
  %v76 = vld [vmem:[%s74 + $0x8] sm:$0xff]
  %s77 = scalar_lea.vmem %s2, 112
  %v78 = vld [vmem:[%s77] sm:$0xff]
  %v79 = vld [vmem:[%s77 + $0x8] sm:$0xff]
  %vm80 = vcmp.ne.s32.totalorder %v16, 0
  %vm81 = vcmp.ne.s32.totalorder %v17, 0
  %v82 = vsel %vm80, %v75, 0
  %v83 = vsel %vm81, %v76, 0
  %v84 = vsel %vm80, %v78, 0
  %v85 = vsel %vm81, %v79, 0
  %v86 = vshll.u32 %v82, 1
  %v87 = vshll.u32 %v83, 1
  %v88 = vshrl.u32 %v84, 31
  %v89 = vshrl.u32 %v85, 31
  %v90 = vor.u32 %v86, %v88
  %v91 = vor.u32 %v87, %v89
  %v92 = vshll.u32 %v84, 1
  %v93 = vshll.u32 %v85, 1
  %v94 = vshrl.u32 %v82, 31
  %v95 = vshrl.u32 %v83, 31
  %v96 = vor.u32 %v92, %v94
  %v97 = vor.u32 %v93, %v95
  %vm98 = vcmp.eq.s32.totalorder %v90, 4294967295
  %vm99 = vcmp.eq.s32.totalorder %v91, 4294967295
  %vm100 = vcmp.eq.s32.totalorder %v96, 4294967295
  %vm101 = vcmp.eq.s32.totalorder %v97, 4294967295
  %vm102 = vmand %vm98, %vm100
  %vm103 = vmand %vm99, %vm101
  %v104 = vsel %vm102, 0, %v90
  %v105 = vsel %vm103, 0, %v91
  %v106 = vsel %vm102, 0, %v96
  %v107 = vsel %vm103, 0, %v97
  %v108 = vsub.s32 %v16, %v106
  %v109 = vsub.s32 %v17, %v107
  %vm110 = vcmp.lt.u32.totalorder %v16, %v106
  %vm111 = vcmp.lt.u32.totalorder %v17, %v107
  %v112 = vsel %vm110, 1, 0
  %v113 = vsel %vm111, 1, 0
  %v114 = vsub.s32 0, %v104
  %v115 = vsub.s32 0, %v105
  %vm116 = vcmp.gt.u32.totalorder %v104, 0
  %vm117 = vcmp.gt.u32.totalorder %v105, 0
  %v118 = vsub.s32 %v114, %v112
  %v119 = vsub.s32 %v115, %v113
  %vm120 = vcmp.lt.u32.totalorder %v114, %v112
  %vm121 = vcmp.lt.u32.totalorder %v115, %v113
  %vm122 = vmor %vm116, %vm120
  %vm123 = vmor %vm117, %vm121
  %v124 = vsel %vm122, 1, 0
  %v125 = vsel %vm123, 1, 0
  %v126 = vsub.s32 %v108, %v124
  %v127 = vsub.s32 %v109, %v125
  %vm128 = vcmp.lt.u32.totalorder %v108, %v124
  %vm129 = vcmp.lt.u32.totalorder %v109, %v125
  %v130 = vsel %vm128, 1, 0
  %v131 = vsel %vm129, 1, 0
  %v132 = vsub.s32 %v118, %v130
  %v133 = vsub.s32 %v119, %v131
  %v134 = vadd.s32 %v78, %v126
  %v135 = vadd.s32 %v79, %v127
  %vm136 = vcmp.lt.u32.totalorder %v134, %v78
  %vm137 = vcmp.lt.u32.totalorder %v135, %v79
  %v138 = vsel %vm136, 1, 0
  %v139 = vsel %vm137, 1, 0
  %v140 = vadd.s32 %v75, %v132
  %v141 = vadd.s32 %v76, %v133
  %vm142 = vcmp.lt.u32.totalorder %v140, %v75
  %vm143 = vcmp.lt.u32.totalorder %v141, %v76
  %v144 = vadd.s32 %v140, %v138
  %v145 = vadd.s32 %v141, %v139
  %vm146 = vcmp.lt.u32.totalorder %v144, %v138
  %vm147 = vcmp.lt.u32.totalorder %v145, %v139
  %vm148 = vmor %vm142, %vm146
  %vm149 = vmor %vm143, %vm147
  %v150 = vsel %vm148, 1, 0
  %v151 = vsel %vm149, 1, 0
  %v152 = vadd.s32 %v134, %v150
  %v153 = vadd.s32 %v135, %v151
  %vm154 = vcmp.lt.u32.totalorder %v152, %v134
  %vm155 = vcmp.lt.u32.totalorder %v153, %v135
  %v156 = vsel %vm154, 1, 0
  %v157 = vsel %vm155, 1, 0
  %v158 = vadd.s32 %v144, %v156
  %v159 = vadd.s32 %v145, %v157
  %vm160 = vcmp.eq.s32.totalorder %v158, 4294967295
  %vm161 = vcmp.eq.s32.totalorder %v159, 4294967295
  %vm162 = vcmp.eq.s32.totalorder %v152, 4294967295
  %vm163 = vcmp.eq.s32.totalorder %v153, 4294967295
  %vm164 = vmand %vm160, %vm162
  %vm165 = vmand %vm161, %vm163
  %v166 = vsel %vm164, 0, %v158
  %v167 = vsel %vm165, 0, %v159
  %v168 = vsel %vm164, 0, %v152
  %v169 = vsel %vm165, 0, %v153
  %v170 = vadd.s32 %v72, %v168
  %v171 = vadd.s32 %v73, %v169
  %vm172 = vcmp.lt.u32.totalorder %v170, %v72
  %vm173 = vcmp.lt.u32.totalorder %v171, %v73
  %v174 = vsel %vm172, 1, 0
  %v175 = vsel %vm173, 1, 0
  %v176 = vadd.s32 %v69, %v166
  %v177 = vadd.s32 %v70, %v167
  %vm178 = vcmp.lt.u32.totalorder %v176, %v69
  %vm179 = vcmp.lt.u32.totalorder %v177, %v70
  %v180 = vadd.s32 %v176, %v174
  %v181 = vadd.s32 %v177, %v175
  %vm182 = vcmp.lt.u32.totalorder %v180, %v174
  %vm183 = vcmp.lt.u32.totalorder %v181, %v175
  %vm184 = vmor %vm178, %vm182
  %vm185 = vmor %vm179, %vm183
  %v186 = vsel %vm184, 1, 0
  %v187 = vsel %vm185, 1, 0
  %v188 = vadd.s32 %v170, %v186
  %v189 = vadd.s32 %v171, %v187
  %vm190 = vcmp.lt.u32.totalorder %v188, %v170
  %vm191 = vcmp.lt.u32.totalorder %v189, %v171
  %v192 = vsel %vm190, 1, 0
  %v193 = vsel %vm191, 1, 0
  %v194 = vadd.s32 %v180, %v192
  %v195 = vadd.s32 %v181, %v193
  %vm196 = vcmp.eq.s32.totalorder %v194, 4294967295
  %vm197 = vcmp.eq.s32.totalorder %v195, 4294967295
  %vm198 = vcmp.eq.s32.totalorder %v188, 4294967295
  %vm199 = vcmp.eq.s32.totalorder %v189, 4294967295
  %vm200 = vmand %vm196, %vm198
  %vm201 = vmand %vm197, %vm199
  %v202 = vsel %vm200, 0, %v194
  %v203 = vsel %vm201, 0, %v195
  %v204 = vsel %vm200, 0, %v188
  %v205 = vsel %vm201, 0, %v189
  %v206 = vsub.s32 %v204, 1
  %v207 = vsub.s32 %v205, 1
  %vm208 = vcmp.lt.u32.totalorder %v204, 1
  %vm209 = vcmp.lt.u32.totalorder %v205, 1
  %v210 = vsel %vm208, 1, 0
  %v211 = vsel %vm209, 1, 0
  %v212 = vsub.s32 %v202, %v210
  %v213 = vsub.s32 %v203, %v211
  %vm214 = vcmp.lt.u32.totalorder %v202, %v210
  %vm215 = vcmp.lt.u32.totalorder %v203, %v211
  %v216 = vsel %vm214, 1, 0
  %v217 = vsel %vm215, 1, 0
  %v218 = vsub.s32 %v206, %v216
  %v219 = vsub.s32 %v207, %v217
  %vm220 = vcmp.lt.u32.totalorder %v206, %v216
  %vm221 = vcmp.lt.u32.totalorder %v207, %v217
  %v222 = vsel %vm220, 1, 0
  %v223 = vsel %vm221, 1, 0
  %v224 = vsub.s32 %v212, %v222
  %v225 = vsub.s32 %v213, %v223
  %v226 = vsub.s32 %v218, %v48
  %v227 = vsub.s32 %v219, %v49
  %vm228 = vcmp.lt.u32.totalorder %v218, %v48
  %vm229 = vcmp.lt.u32.totalorder %v219, %v49
  %v230 = vsel %vm228, 1, 0
  %v231 = vsel %vm229, 1, 0
  %v232 = vsub.s32 %v224, %v230
  %v233 = vsub.s32 %v225, %v231
  %vm234 = vcmp.lt.u32.totalorder %v224, %v230
  %vm235 = vcmp.lt.u32.totalorder %v225, %v231
  %v236 = vsel %vm234, 1, 0
  %v237 = vsel %vm235, 1, 0
  %v238 = vsub.s32 %v226, %v236
  %v239 = vsub.s32 %v227, %v237
  %vm240 = vcmp.lt.u32.totalorder %v226, %v236
  %vm241 = vcmp.lt.u32.totalorder %v227, %v237
  %v242 = vsel %vm240, 1, 0
  %v243 = vsel %vm241, 1, 0
  %v244 = vsub.s32 %v232, %v242
  %v245 = vsub.s32 %v233, %v243
  %v246 = vadd.s32 %v238, %v66
  %v247 = vadd.s32 %v239, %v67
  %vm248 = vcmp.lt.u32.totalorder %v246, %v238
  %vm249 = vcmp.lt.u32.totalorder %v247, %v239
  %v250 = vsel %vm248, 1, 0
  %v251 = vsel %vm249, 1, 0
  %v252 = vadd.s32 %v244, %v250
  %v253 = vadd.s32 %v245, %v251
  %vm254 = vcmp.lt.u32.totalorder %v252, %v250
  %vm255 = vcmp.lt.u32.totalorder %v253, %v251
  %v256 = vsel %vm254, 1, 0
  %v257 = vsel %vm255, 1, 0
  %v258 = vadd.s32 %v246, %v256
  %v259 = vadd.s32 %v247, %v257
  %vm260 = vcmp.lt.u32.totalorder %v258, %v246
  %vm261 = vcmp.lt.u32.totalorder %v259, %v247
  %v262 = vsel %vm260, 1, 0
  %v263 = vsel %vm261, 1, 0
  %v264 = vadd.s32 %v252, %v262
  %v265 = vadd.s32 %v253, %v263
  %vm266 = vcmp.eq.s32.totalorder %v264, 4294967295
  %vm267 = vcmp.eq.s32.totalorder %v265, 4294967295
  %vm268 = vcmp.eq.s32.totalorder %v258, 4294967295
  %vm269 = vcmp.eq.s32.totalorder %v259, 4294967295
  %vm270 = vmand %vm266, %vm268
  %vm271 = vmand %vm267, %vm269
  %v272 = vsel %vm270, 0, %v264
  %v273 = vsel %vm271, 0, %v265
  %v274 = vsel %vm270, 0, %v258
  %v275 = vsel %vm271, 0, %v259
  %v276 = vsub.s32 %v25, %v274
  %v277 = vsub.s32 %v26, %v275
  %vm278 = vcmp.lt.u32.totalorder %v25, %v274
  %vm279 = vcmp.lt.u32.totalorder %v26, %v275
  %v280 = vsel %vm278, 1, 0
  %v281 = vsel %vm279, 1, 0
  %v282 = vsub.s32 %v22, %v272
  %v283 = vsub.s32 %v23, %v273
  %vm284 = vcmp.lt.u32.totalorder %v22, %v272
  %vm285 = vcmp.lt.u32.totalorder %v23, %v273
  %v286 = vsub.s32 %v282, %v280
  %v287 = vsub.s32 %v283, %v281
  %vm288 = vcmp.lt.u32.totalorder %v282, %v280
  %vm289 = vcmp.lt.u32.totalorder %v283, %v281
  %vm290 = vmor %vm284, %vm288
  %vm291 = vmor %vm285, %vm289
  %v292 = vsel %vm290, 1, 0
  %v293 = vsel %vm291, 1, 0
  %v294 = vsub.s32 %v276, %v292
  %v295 = vsub.s32 %v277, %v293
  %vm296 = vcmp.lt.u32.totalorder %v276, %v292
  %vm297 = vcmp.lt.u32.totalorder %v277, %v293
  %v298 = vsel %vm296, 1, 0
  %v299 = vsel %vm297, 1, 0
  %v300 = vsub.s32 %v286, %v298
  %v301 = vsub.s32 %v287, %v299
  %s302 = scalar_lea.vmem %s2, 128
  %v303 = vld [vmem:[%s302] sm:$0xff]
  %v304 = vld [vmem:[%s302 + $0x8] sm:$0xff]
  %s305 = scalar_lea.vmem %s2, 144
  %v306 = vld [vmem:[%s305] sm:$0xff]
  %v307 = vld [vmem:[%s305 + $0x8] sm:$0xff]
  %s308 = scalar_lea.vmem %s2, 160
  %v309 = vld [vmem:[%s308] sm:$0xff]
  %v310 = vld [vmem:[%s308 + $0x8] sm:$0xff]
  %s311 = scalar_lea.vmem %s2, 176
  %v312 = vld [vmem:[%s311] sm:$0xff]
  %v313 = vld [vmem:[%s311 + $0x8] sm:$0xff]
  %s314 = scalar_lea.vmem %s2, 192
  %v315 = vld [vmem:[%s314] sm:$0xff]
  %v316 = vld [vmem:[%s314 + $0x8] sm:$0xff]
  %s317 = scalar_lea.vmem %s2, 208
  %v318 = vld [vmem:[%s317] sm:$0xff]
  %v319 = vld [vmem:[%s317 + $0x8] sm:$0xff]
  %s320 = scalar_lea.vmem %s2, 224
  %v321 = vld [vmem:[%s320] sm:$0xff]
  %v322 = vld [vmem:[%s320 + $0x8] sm:$0xff]
  %s323 = scalar_lea.vmem %s2, 240
  %v324 = vld [vmem:[%s323] sm:$0xff]
  %v325 = vld [vmem:[%s323 + $0x8] sm:$0xff]
  %v326 = vshll.u32 %v300, 1
  %v327 = vshll.u32 %v301, 1
  %v328 = vshrl.u32 %v294, 31
  %v329 = vshrl.u32 %v295, 31
  %v330 = vor.u32 %v326, %v328
  %v331 = vor.u32 %v327, %v329
  %v332 = vshll.u32 %v294, 1
  %v333 = vshll.u32 %v295, 1
  %v334 = vshrl.u32 %v300, 31
  %v335 = vshrl.u32 %v301, 31
  %v336 = vor.u32 %v332, %v334
  %v337 = vor.u32 %v333, %v335
  %vm338 = vcmp.eq.s32.totalorder %v330, 4294967295
  %vm339 = vcmp.eq.s32.totalorder %v331, 4294967295
  %vm340 = vcmp.eq.s32.totalorder %v336, 4294967295
  %vm341 = vcmp.eq.s32.totalorder %v337, 4294967295
  %vm342 = vmand %vm338, %vm340
  %vm343 = vmand %vm339, %vm341
  %v344 = vsel %vm342, 0, %v330
  %v345 = vsel %vm343, 0, %v331
  %v346 = vsel %vm342, 0, %v336
  %v347 = vsel %vm343, 0, %v337
  %v348 = vadd.s32 %v306, %v346
  %v349 = vadd.s32 %v307, %v347
  %vm350 = vcmp.lt.u32.totalorder %v348, %v306
  %vm351 = vcmp.lt.u32.totalorder %v349, %v307
  %v352 = vsel %vm350, 1, 0
  %v353 = vsel %vm351, 1, 0
  %v354 = vadd.s32 %v303, %v344
  %v355 = vadd.s32 %v304, %v345
  %vm356 = vcmp.lt.u32.totalorder %v354, %v303
  %vm357 = vcmp.lt.u32.totalorder %v355, %v304
  %v358 = vadd.s32 %v354, %v352
  %v359 = vadd.s32 %v355, %v353
  %vm360 = vcmp.lt.u32.totalorder %v358, %v352
  %vm361 = vcmp.lt.u32.totalorder %v359, %v353
  %vm362 = vmor %vm356, %vm360
  %vm363 = vmor %vm357, %vm361
  %v364 = vsel %vm362, 1, 0
  %v365 = vsel %vm363, 1, 0
  %v366 = vadd.s32 %v348, %v364
  %v367 = vadd.s32 %v349, %v365
  %vm368 = vcmp.lt.u32.totalorder %v366, %v348
  %vm369 = vcmp.lt.u32.totalorder %v367, %v349
  %v370 = vsel %vm368, 1, 0
  %v371 = vsel %vm369, 1, 0
  %v372 = vadd.s32 %v358, %v370
  %v373 = vadd.s32 %v359, %v371
  %vm374 = vcmp.eq.s32.totalorder %v372, 4294967295
  %vm375 = vcmp.eq.s32.totalorder %v373, 4294967295
  %vm376 = vcmp.eq.s32.totalorder %v366, 4294967295
  %vm377 = vcmp.eq.s32.totalorder %v367, 4294967295
  %vm378 = vmand %vm374, %vm376
  %vm379 = vmand %vm375, %vm377
  %v380 = vsel %vm378, 0, %v372
  %v381 = vsel %vm379, 0, %v373
  %v382 = vsel %vm378, 0, %v366
  %v383 = vsel %vm379, 0, %v367
  %v384 = vadd.s32 %v382, %v318
  %v385 = vadd.s32 %v383, %v319
  %vm386 = vcmp.lt.u32.totalorder %v384, %v382
  %vm387 = vcmp.lt.u32.totalorder %v385, %v383
  %v388 = vsel %vm386, 1, 0
  %v389 = vsel %vm387, 1, 0
  %v390 = vadd.s32 %v380, %v315
  %v391 = vadd.s32 %v381, %v316
  %vm392 = vcmp.lt.u32.totalorder %v390, %v380
  %vm393 = vcmp.lt.u32.totalorder %v391, %v381
  %v394 = vadd.s32 %v390, %v388
  %v395 = vadd.s32 %v391, %v389
  %vm396 = vcmp.lt.u32.totalorder %v394, %v388
  %vm397 = vcmp.lt.u32.totalorder %v395, %v389
  %vm398 = vmor %vm392, %vm396
  %vm399 = vmor %vm393, %vm397
  %v400 = vsel %vm398, 1, 0
  %v401 = vsel %vm399, 1, 0
  %v402 = vadd.s32 %v384, %v400
  %v403 = vadd.s32 %v385, %v401
  %vm404 = vcmp.lt.u32.totalorder %v402, %v384
  %vm405 = vcmp.lt.u32.totalorder %v403, %v385
  %v406 = vsel %vm404, 1, 0
  %v407 = vsel %vm405, 1, 0
  %v408 = vadd.s32 %v394, %v406
  %v409 = vadd.s32 %v395, %v407
  %vm410 = vcmp.eq.s32.totalorder %v408, 4294967295
  %vm411 = vcmp.eq.s32.totalorder %v409, 4294967295
  %vm412 = vcmp.eq.s32.totalorder %v402, 4294967295
  %vm413 = vcmp.eq.s32.totalorder %v403, 4294967295
  %vm414 = vmand %vm410, %vm412
  %vm415 = vmand %vm411, %vm413
  %v416 = vsel %vm414, 0, %v402
  %v417 = vsel %vm415, 0, %v403
  %vm418 = vcmp.ne.s32.totalorder %v20, 0
  %vm419 = vcmp.ne.s32.totalorder %v21, 0
  %v420 = vsel %vm418, %v321, 0
  %v421 = vsel %vm419, %v322, 0
  %v422 = vsel %vm418, %v324, 0
  %v423 = vsel %vm419, %v325, 0
  %v424 = vshll.u32 %v420, 1
  %v425 = vshll.u32 %v421, 1
  %v426 = vshrl.u32 %v422, 31
  %v427 = vshrl.u32 %v423, 31
  %v428 = vor.u32 %v424, %v426
  %v429 = vor.u32 %v425, %v427
  %v430 = vshll.u32 %v422, 1
  %v431 = vshll.u32 %v423, 1
  %v432 = vsub.s32 %v324, %v430
  %v433 = vsub.s32 %v325, %v431
  %vm434 = vcmp.lt.u32.totalorder %v324, %v430
  %vm435 = vcmp.lt.u32.totalorder %v325, %v431
  %v436 = vsel %vm434, 1, 0
  %v437 = vsel %vm435, 1, 0
  %v438 = vsub.s32 %v321, %v428
  %v439 = vsub.s32 %v322, %v429
  %v440 = vsub.s32 %v438, %v436
  %v441 = vsub.s32 %v439, %v437
  %v442 = vand.u32 %v416, 1
  %v443 = vand.u32 %v417, 1
  %vm444 = vcmp.ne.s32.totalorder %v442, 0
  %vm445 = vcmp.ne.s32.totalorder %v443, 0
  %v446 = vsel %vm444, %v309, 0
  %v447 = vsel %vm445, %v310, 0
  %v448 = vsel %vm444, %v312, 0
  %v449 = vsel %vm445, %v313, 0
  %v450 = vshll.u32 %v446, 1
  %v451 = vshll.u32 %v447, 1
  %v452 = vshrl.u32 %v448, 31
  %v453 = vshrl.u32 %v449, 31
  %v454 = vor.u32 %v450, %v452
  %v455 = vor.u32 %v451, %v453
  %v456 = vshll.u32 %v448, 1
  %v457 = vshll.u32 %v449, 1
  %v458 = vsub.s32 %v312, %v456
  %v459 = vsub.s32 %v313, %v457
  %vm460 = vcmp.lt.u32.totalorder %v312, %v456
  %vm461 = vcmp.lt.u32.totalorder %v313, %v457
  %v462 = vsel %vm460, 1, 0
  %v463 = vsel %vm461, 1, 0
  %v464 = vsub.s32 %v309, %v454
  %v465 = vsub.s32 %v310, %v455
  %v466 = vsub.s32 %v464, %v462
  %v467 = vsub.s32 %v465, %v463
  %s468 = scalar_lea.vmem %s2, 256
  %v469 = vld [vmem:[%s468] sm:$0xff]
  %v470 = vld [vmem:[%s468 + $0x8] sm:$0xff]
  %s471 = scalar_lea.vmem %s2, 272
  %v472 = vld [vmem:[%s471] sm:$0xff]
  %v473 = vld [vmem:[%s471 + $0x8] sm:$0xff]
  %s474 = scalar_lea.vmem %s2, 288
  %v475 = vld [vmem:[%s474] sm:$0xff]
  %v476 = vld [vmem:[%s474 + $0x8] sm:$0xff]
  %s477 = scalar_lea.vmem %s2, 304
  %v478 = vld [vmem:[%s477] sm:$0xff]
  %v479 = vld [vmem:[%s477 + $0x8] sm:$0xff]
  %s480 = scalar_lea.vmem %s2, 320
  %v481 = vld [vmem:[%s480] sm:$0xff]
  %v482 = vld [vmem:[%s480 + $0x8] sm:$0xff]
  %s483 = scalar_lea.vmem %s2, 336
  %v484 = vld [vmem:[%s483] sm:$0xff]
  %v485 = vld [vmem:[%s483 + $0x8] sm:$0xff]
  %s486 = scalar_lea.vmem %s2, 352
  %v487 = vld [vmem:[%s486] sm:$0xff]
  %v488 = vld [vmem:[%s486 + $0x8] sm:$0xff]
  %s489 = scalar_lea.vmem %s2, 368
  %v490 = vld [vmem:[%s489] sm:$0xff]
  %v491 = vld [vmem:[%s489 + $0x8] sm:$0xff]
  %s492 = scalar_lea.vmem %s2, 384
  %v493 = vld [vmem:[%s492] sm:$0xff]
  %v494 = vld [vmem:[%s492 + $0x8] sm:$0xff]
  %s495 = scalar_lea.vmem %s2, 400
  %v496 = vld [vmem:[%s495] sm:$0xff]
  %v497 = vld [vmem:[%s495 + $0x8] sm:$0xff]
  %v498 = vsub.s32 %v432, %v472
  %v499 = vsub.s32 %v433, %v473
  %vm500 = vcmp.lt.u32.totalorder %v432, %v472
  %vm501 = vcmp.lt.u32.totalorder %v433, %v473
  %v502 = vsel %vm500, 1, 0
  %v503 = vsel %vm501, 1, 0
  %v504 = vsub.s32 %v440, %v469
  %v505 = vsub.s32 %v441, %v470
  %v506 = vsub.s32 %v504, %v502
  %v507 = vsub.s32 %v505, %v503
  %v508 = vadd.s32 %v490, %v498
  %v509 = vadd.s32 %v491, %v499
  %vm510 = vcmp.lt.u32.totalorder %v508, %v490
  %vm511 = vcmp.lt.u32.totalorder %v509, %v491
  %v512 = vsel %vm510, 1, 0
  %v513 = vsel %vm511, 1, 0
  %v514 = vadd.s32 %v487, %v506
  %v515 = vadd.s32 %v488, %v507
  %v516 = vadd.s32 %v514, %v512
  %v517 = vadd.s32 %v515, %v513
  %v518 = vsub.s32 %v458, %v478
  %v519 = vsub.s32 %v459, %v479
  %vm520 = vcmp.lt.u32.totalorder %v458, %v478
  %vm521 = vcmp.lt.u32.totalorder %v459, %v479
  %v522 = vsel %vm520, 1, 0
  %v523 = vsel %vm521, 1, 0
  %v524 = vsub.s32 %v466, %v475
  %v525 = vsub.s32 %v467, %v476
  %v526 = vsub.s32 %v524, %v522
  %v527 = vsub.s32 %v525, %v523
  %v528 = vadd.s32 %v496, %v518
  %v529 = vadd.s32 %v497, %v519
  %vm530 = vcmp.lt.u32.totalorder %v528, %v496
  %vm531 = vcmp.lt.u32.totalorder %v529, %v497
  %v532 = vsel %vm530, 1, 0
  %v533 = vsel %vm531, 1, 0
  %v534 = vadd.s32 %v493, %v526
  %v535 = vadd.s32 %v494, %v527
  %v536 = vadd.s32 %v534, %v532
  %v537 = vadd.s32 %v535, %v533
  %v538 = vand.u32 %v432, 65535
  %v539 = vand.u32 %v433, 65535
  %v540 = vshrl.u32 %v432, 16
  %v541 = vshrl.u32 %v433, 16
  %v542 = vand.u32 %v528, 65535
  %v543 = vand.u32 %v529, 65535
  %v544 = vshrl.u32 %v528, 16
  %v545 = vshrl.u32 %v529, 16
  %v546 = vmul.u32 %v538, %v542
  %v547 = vmul.u32 %v539, %v543
  %v548 = vmul.u32 %v538, %v544
  %v549 = vmul.u32 %v539, %v545
  %v550 = vmul.u32 %v540, %v542
  %v551 = vmul.u32 %v541, %v543
  %v552 = vmul.u32 %v540, %v544
  %v553 = vmul.u32 %v541, %v545
  %v554 = vadd.s32 %v548, %v550
  %v555 = vadd.s32 %v549, %v551
  %vm556 = vcmp.lt.u32.totalorder %v554, %v548
  %vm557 = vcmp.lt.u32.totalorder %v555, %v549
  %v558 = vsel %vm556, 1, 0
  %v559 = vsel %vm557, 1, 0
  %v560 = vshll.u32 %v554, 16
  %v561 = vshll.u32 %v555, 16
  %v562 = vadd.s32 %v546, %v560
  %v563 = vadd.s32 %v547, %v561
  %vm564 = vcmp.lt.u32.totalorder %v562, %v546
  %vm565 = vcmp.lt.u32.totalorder %v563, %v547
  %v566 = vsel %vm564, 1, 0
  %v567 = vsel %vm565, 1, 0
  %v568 = vshrl.u32 %v554, 16
  %v569 = vshrl.u32 %v555, 16
  %v570 = vadd.s32 %v552, %v568
  %v571 = vadd.s32 %v553, %v569
  %v572 = vshll.u32 %v558, 16
  %v573 = vshll.u32 %v559, 16
  %v574 = vadd.s32 %v570, %v572
  %v575 = vadd.s32 %v571, %v573
  %v576 = vadd.s32 %v574, %v566
  %v577 = vadd.s32 %v575, %v567
  %v578 = vmul.u32 %v432, %v536
  %v579 = vmul.u32 %v433, %v537
  %v580 = vadd.s32 %v576, %v578
  %v581 = vadd.s32 %v577, %v579
  %v582 = vmul.u32 %v440, %v528
  %v583 = vmul.u32 %v441, %v529
  %v584 = vadd.s32 %v580, %v582
  %v585 = vadd.s32 %v581, %v583
  %v586 = vand.u32 %v458, 65535
  %v587 = vand.u32 %v459, 65535
  %v588 = vshrl.u32 %v458, 16
  %v589 = vshrl.u32 %v459, 16
  %v590 = vand.u32 %v508, 65535
  %v591 = vand.u32 %v509, 65535
  %v592 = vshrl.u32 %v508, 16
  %v593 = vshrl.u32 %v509, 16
  %v594 = vmul.u32 %v586, %v590
  %v595 = vmul.u32 %v587, %v591
  %v596 = vmul.u32 %v586, %v592
  %v597 = vmul.u32 %v587, %v593
  %v598 = vmul.u32 %v588, %v590
  %v599 = vmul.u32 %v589, %v591
  %v600 = vmul.u32 %v588, %v592
  %v601 = vmul.u32 %v589, %v593
  %v602 = vadd.s32 %v596, %v598
  %v603 = vadd.s32 %v597, %v599
  %vm604 = vcmp.lt.u32.totalorder %v602, %v596
  %vm605 = vcmp.lt.u32.totalorder %v603, %v597
  %v606 = vsel %vm604, 1, 0
  %v607 = vsel %vm605, 1, 0
  %v608 = vshll.u32 %v602, 16
  %v609 = vshll.u32 %v603, 16
  %v610 = vadd.s32 %v594, %v608
  %v611 = vadd.s32 %v595, %v609
  %vm612 = vcmp.lt.u32.totalorder %v610, %v594
  %vm613 = vcmp.lt.u32.totalorder %v611, %v595
  %v614 = vsel %vm612, 1, 0
  %v615 = vsel %vm613, 1, 0
  %v616 = vshrl.u32 %v602, 16
  %v617 = vshrl.u32 %v603, 16
  %v618 = vadd.s32 %v600, %v616
  %v619 = vadd.s32 %v601, %v617
  %v620 = vshll.u32 %v606, 16
  %v621 = vshll.u32 %v607, 16
  %v622 = vadd.s32 %v618, %v620
  %v623 = vadd.s32 %v619, %v621
  %v624 = vadd.s32 %v622, %v614
  %v625 = vadd.s32 %v623, %v615
  %v626 = vmul.u32 %v458, %v516
  %v627 = vmul.u32 %v459, %v517
  %v628 = vadd.s32 %v624, %v626
  %v629 = vadd.s32 %v625, %v627
  %v630 = vmul.u32 %v466, %v508
  %v631 = vmul.u32 %v467, %v509
  %v632 = vadd.s32 %v628, %v630
  %v633 = vadd.s32 %v629, %v631
  %v634 = vadd.s32 %v562, %v610
  %v635 = vadd.s32 %v563, %v611
  %vm636 = vcmp.lt.u32.totalorder %v634, %v562
  %vm637 = vcmp.lt.u32.totalorder %v635, %v563
  %v638 = vsel %vm636, 1, 0
  %v639 = vsel %vm637, 1, 0
  %v640 = vadd.s32 %v584, %v632
  %v641 = vadd.s32 %v585, %v633
  %v642 = vadd.s32 %v640, %v638
  %v643 = vadd.s32 %v641, %v639
  %v644 = vadd.s32 %v634, %v484
  %v645 = vadd.s32 %v635, %v485
  %vm646 = vcmp.lt.u32.totalorder %v644, %v634
  %vm647 = vcmp.lt.u32.totalorder %v645, %v635
  %v648 = vsel %vm646, 1, 0
  %v649 = vsel %vm647, 1, 0
  %v650 = vadd.s32 %v642, %v481
  %v651 = vadd.s32 %v643, %v482
  %v652 = vadd.s32 %v650, %v648
  %v653 = vadd.s32 %v651, %v649
  %v654 = vadd.s32 %v432, %v458
  %v655 = vadd.s32 %v433, %v459
  %vm656 = vcmp.lt.u32.totalorder %v654, %v432
  %vm657 = vcmp.lt.u32.totalorder %v655, %v433
  %v658 = vsel %vm656, 1, 0
  %v659 = vsel %vm657, 1, 0
  %v660 = vadd.s32 %v440, %v466
  %v661 = vadd.s32 %v441, %v467
  %v662 = vadd.s32 %v660, %v658
  %v663 = vadd.s32 %v661, %v659
  %v664 = vshll.u32 %v652, 1
  %v665 = vshll.u32 %v653, 1
  %v666 = vshrl.u32 %v644, 31
  %v667 = vshrl.u32 %v645, 31
  %v668 = vor.u32 %v664, %v666
  %v669 = vor.u32 %v665, %v667
  %v670 = vshll.u32 %v644, 1
  %v671 = vshll.u32 %v645, 1
  %v672 = vsub.s32 %v654, %v670
  %v673 = vsub.s32 %v655, %v671
  %vm674 = vcmp.lt.u32.totalorder %v654, %v670
  %vm675 = vcmp.lt.u32.totalorder %v655, %v671
  %v676 = vsel %vm674, 1, 0
  %v677 = vsel %vm675, 1, 0
  %v678 = vsub.s32 %v662, %v668
  %v679 = vsub.s32 %v663, %v669
  %v680 = vsub.s32 %v678, %v676
  %v681 = vsub.s32 %v679, %v677
  %v682 = vsub.s32 0, %v672
  %v683 = vsub.s32 0, %v673
  %vm684 = vcmp.ne.s32.totalorder %v672, 0
  %vm685 = vcmp.ne.s32.totalorder %v673, 0
  %v686 = vsel %vm684, 1, 0
  %v687 = vsel %vm685, 1, 0
  %v688 = vsub.s32 0, %v680
  %v689 = vsub.s32 0, %v681
  %v690 = vsub.s32 %v688, %v686
  %v691 = vsub.s32 %v689, %v687
  %s692 = scalar_lea.vmem %s2, 416
  %v693 = vld [vmem:[%s692] sm:$0xff]
  %v694 = vld [vmem:[%s692 + $0x8] sm:$0xff]
  %s695 = scalar_lea.vmem %s2, 432
  %v696 = vld [vmem:[%s695] sm:$0xff]
  %v697 = vld [vmem:[%s695 + $0x8] sm:$0xff]
  %s698 = scalar_lea.vmem %s2, 448
  %v699 = vld [vmem:[%s698] sm:$0xff]
  %v700 = vld [vmem:[%s698 + $0x8] sm:$0xff]
  %s701 = scalar_lea.vmem %s2, 464
  %v702 = vld [vmem:[%s701] sm:$0xff]
  %v703 = vld [vmem:[%s701 + $0x8] sm:$0xff]
  %s704 = scalar_lea.vmem %s2, 480
  %v705 = vld [vmem:[%s704] sm:$0xff]
  %v706 = vld [vmem:[%s704 + $0x8] sm:$0xff]
  %s707 = scalar_lea.vmem %s2, 496
  %v708 = vld [vmem:[%s707] sm:$0xff]
  %v709 = vld [vmem:[%s707 + $0x8] sm:$0xff]
  %s710 = scalar_lea.vmem %s2, 512
  %v711 = vld [vmem:[%s710] sm:$0xff]
  %v712 = vld [vmem:[%s710 + $0x8] sm:$0xff]
  %s713 = scalar_lea.vmem %s2, 528
  %v714 = vld [vmem:[%s713] sm:$0xff]
  %v715 = vld [vmem:[%s713 + $0x8] sm:$0xff]
  %s716 = scalar_lea.vmem %s2, 544
  %v717 = vld [vmem:[%s716] sm:$0xff]
  %v718 = vld [vmem:[%s716 + $0x8] sm:$0xff]
  %s719 = scalar_lea.vmem %s2, 560
  %v720 = vld [vmem:[%s719] sm:$0xff]
  %v721 = vld [vmem:[%s719 + $0x8] sm:$0xff]
  %v722 = vsub.s32 %v25, %v696
  %v723 = vsub.s32 %v26, %v697
  %vm724 = vcmp.lt.u32.totalorder %v25, %v696
  %vm725 = vcmp.lt.u32.totalorder %v26, %v697
  %v726 = vsel %vm724, 1, 0
  %v727 = vsel %vm725, 1, 0
  %v728 = vsub.s32 %v22, %v693
  %v729 = vsub.s32 %v23, %v694
  %v730 = vsub.s32 %v728, %v726
  %v731 = vsub.s32 %v729, %v727
  %v732 = vadd.s32 %v714, %v722
  %v733 = vadd.s32 %v715, %v723
  %vm734 = vcmp.lt.u32.totalorder %v732, %v714
  %vm735 = vcmp.lt.u32.totalorder %v733, %v715
  %v736 = vsel %vm734, 1, 0
  %v737 = vsel %vm735, 1, 0
  %v738 = vadd.s32 %v711, %v730
  %v739 = vadd.s32 %v712, %v731
  %v740 = vadd.s32 %v738, %v736
  %v741 = vadd.s32 %v739, %v737
  %v742 = vsub.s32 %v682, %v702
  %v743 = vsub.s32 %v683, %v703
  %vm744 = vcmp.lt.u32.totalorder %v682, %v702
  %vm745 = vcmp.lt.u32.totalorder %v683, %v703
  %v746 = vsel %vm744, 1, 0
  %v747 = vsel %vm745, 1, 0
  %v748 = vsub.s32 %v690, %v699
  %v749 = vsub.s32 %v691, %v700
  %v750 = vsub.s32 %v748, %v746
  %v751 = vsub.s32 %v749, %v747
  %v752 = vadd.s32 %v720, %v742
  %v753 = vadd.s32 %v721, %v743
  %vm754 = vcmp.lt.u32.totalorder %v752, %v720
  %vm755 = vcmp.lt.u32.totalorder %v753, %v721
  %v756 = vsel %vm754, 1, 0
  %v757 = vsel %vm755, 1, 0
  %v758 = vadd.s32 %v717, %v750
  %v759 = vadd.s32 %v718, %v751
  %v760 = vadd.s32 %v758, %v756
  %v761 = vadd.s32 %v759, %v757
  %v762 = vand.u32 %v25, 65535
  %v763 = vand.u32 %v26, 65535
  %v764 = vshrl.u32 %v25, 16
  %v765 = vshrl.u32 %v26, 16
  %v766 = vand.u32 %v752, 65535
  %v767 = vand.u32 %v753, 65535
  %v768 = vshrl.u32 %v752, 16
  %v769 = vshrl.u32 %v753, 16
  %v770 = vmul.u32 %v762, %v766
  %v771 = vmul.u32 %v763, %v767
  %v772 = vmul.u32 %v762, %v768
  %v773 = vmul.u32 %v763, %v769
  %v774 = vmul.u32 %v764, %v766
  %v775 = vmul.u32 %v765, %v767
  %v776 = vmul.u32 %v764, %v768
  %v777 = vmul.u32 %v765, %v769
  %v778 = vadd.s32 %v772, %v774
  %v779 = vadd.s32 %v773, %v775
  %vm780 = vcmp.lt.u32.totalorder %v778, %v772
  %vm781 = vcmp.lt.u32.totalorder %v779, %v773
  %v782 = vsel %vm780, 1, 0
  %v783 = vsel %vm781, 1, 0
  %v784 = vshll.u32 %v778, 16
  %v785 = vshll.u32 %v779, 16
  %v786 = vadd.s32 %v770, %v784
  %v787 = vadd.s32 %v771, %v785
  %vm788 = vcmp.lt.u32.totalorder %v786, %v770
  %vm789 = vcmp.lt.u32.totalorder %v787, %v771
  %v790 = vsel %vm788, 1, 0
  %v791 = vsel %vm789, 1, 0
  %v792 = vshrl.u32 %v778, 16
  %v793 = vshrl.u32 %v779, 16
  %v794 = vadd.s32 %v776, %v792
  %v795 = vadd.s32 %v777, %v793
  %v796 = vshll.u32 %v782, 16
  %v797 = vshll.u32 %v783, 16
  %v798 = vadd.s32 %v794, %v796
  %v799 = vadd.s32 %v795, %v797
  %v800 = vadd.s32 %v798, %v790
  %v801 = vadd.s32 %v799, %v791
  %v802 = vmul.u32 %v25, %v760
  %v803 = vmul.u32 %v26, %v761
  %v804 = vadd.s32 %v800, %v802
  %v805 = vadd.s32 %v801, %v803
  %v806 = vmul.u32 %v22, %v752
  %v807 = vmul.u32 %v23, %v753
  %v808 = vadd.s32 %v804, %v806
  %v809 = vadd.s32 %v805, %v807
  %v810 = vand.u32 %v682, 65535
  %v811 = vand.u32 %v683, 65535
  %v812 = vshrl.u32 %v682, 16
  %v813 = vshrl.u32 %v683, 16
  %v814 = vand.u32 %v732, 65535
  %v815 = vand.u32 %v733, 65535
  %v816 = vshrl.u32 %v732, 16
  %v817 = vshrl.u32 %v733, 16
  %v818 = vmul.u32 %v810, %v814
  %v819 = vmul.u32 %v811, %v815
  %v820 = vmul.u32 %v810, %v816
  %v821 = vmul.u32 %v811, %v817
  %v822 = vmul.u32 %v812, %v814
  %v823 = vmul.u32 %v813, %v815
  %v824 = vmul.u32 %v812, %v816
  %v825 = vmul.u32 %v813, %v817
  %v826 = vadd.s32 %v820, %v822
  %v827 = vadd.s32 %v821, %v823
  %vm828 = vcmp.lt.u32.totalorder %v826, %v820
  %vm829 = vcmp.lt.u32.totalorder %v827, %v821
  %v830 = vsel %vm828, 1, 0
  %v831 = vsel %vm829, 1, 0
  %v832 = vshll.u32 %v826, 16
  %v833 = vshll.u32 %v827, 16
  %v834 = vadd.s32 %v818, %v832
  %v835 = vadd.s32 %v819, %v833
  %vm836 = vcmp.lt.u32.totalorder %v834, %v818
  %vm837 = vcmp.lt.u32.totalorder %v835, %v819
  %v838 = vsel %vm836, 1, 0
  %v839 = vsel %vm837, 1, 0
  %v840 = vshrl.u32 %v826, 16
  %v841 = vshrl.u32 %v827, 16
  %v842 = vadd.s32 %v824, %v840
  %v843 = vadd.s32 %v825, %v841
  %v844 = vshll.u32 %v830, 16
  %v845 = vshll.u32 %v831, 16
  %v846 = vadd.s32 %v842, %v844
  %v847 = vadd.s32 %v843, %v845
  %v848 = vadd.s32 %v846, %v838
  %v849 = vadd.s32 %v847, %v839
  %v850 = vmul.u32 %v682, %v740
  %v851 = vmul.u32 %v683, %v741
  %v852 = vadd.s32 %v848, %v850
  %v853 = vadd.s32 %v849, %v851
  %v854 = vmul.u32 %v690, %v732
  %v855 = vmul.u32 %v691, %v733
  %v856 = vadd.s32 %v852, %v854
  %v857 = vadd.s32 %v853, %v855
  %v858 = vadd.s32 %v786, %v834
  %v859 = vadd.s32 %v787, %v835
  %vm860 = vcmp.lt.u32.totalorder %v858, %v786
  %vm861 = vcmp.lt.u32.totalorder %v859, %v787
  %v862 = vsel %vm860, 1, 0
  %v863 = vsel %vm861, 1, 0
  %v864 = vadd.s32 %v808, %v856
  %v865 = vadd.s32 %v809, %v857
  %v866 = vadd.s32 %v864, %v862
  %v867 = vadd.s32 %v865, %v863
  %v868 = vadd.s32 %v858, %v708
  %v869 = vadd.s32 %v859, %v709
  %vm870 = vcmp.lt.u32.totalorder %v868, %v858
  %vm871 = vcmp.lt.u32.totalorder %v869, %v859
  %v872 = vsel %vm870, 1, 0
  %v873 = vsel %vm871, 1, 0
  %v874 = vadd.s32 %v866, %v705
  %v875 = vadd.s32 %v867, %v706
  %v876 = vadd.s32 %v874, %v872
  %v877 = vadd.s32 %v875, %v873
  %878 = vst [vmem:[%s3] sm:$0xff] %v876
  %879 = vst [vmem:[%s3 + $0x8] sm:$0xff] %v877
  %s880 = scalar_lea.vmem %s3, 16
  %881 = vst [vmem:[%s880] sm:$0xff] %v868
  %882 = vst [vmem:[%s880 + $0x8] sm:$0xff] %v869
  // Predicated region
  $region14: #{secure_relu_client.1} parent=0 // pred_check
    _
  $region15: #{secure_relu_client.1} parent=0 // pred_check_branch
    %884 = sbr.rel (0) target = $region17
  $region16: #{secure_relu_client.1} parent=0 // pred_region
    _
  $region17: #{secure_relu_client.1} parent=0 // pred_fallthru
    _
  // Predicated region
  $region18: #{secure_relu_client.1} parent=0 // pred_check
    _
  $region19: #{secure_relu_client.1} parent=0 // pred_check_branch
    %886 = sbr.rel (0) target = $region21
  $region20: #{secure_relu_client.1} parent=0 // pred_region
    _
  $region21: #{secure_relu_client.1} parent=0 // pred_fallthru
    _

</llo_original>
